<compile_context>
chip_gen: v6e
topology: v6e:2x2x1
jax: 0.10.0
libtpu: 0.0.40
codegen_flags: <defaults>
</compile_context>

<pallas_src>
import functools
import math

import jax
import jax.numpy as jnp
from jax.experimental import pallas as pl
from jax.experimental.pallas import tpu as pltpu

EPS = 1e-5  # nn.LayerNorm default


def _vmem_limit_bytes():
    """Scoped-VMEM budget per TPU generation: physical VMEM minus >=16 MiB slack
    (v7x: 64 MiB per TensorCore -> 48 MiB; v5e/v6e: 128 MiB -> capped at 100 MiB)."""
    cap = 128 * 1024 * 1024
    try:
        info = pltpu.get_tpu_info()
        cap = int(getattr(info, "vmem_capacity_bytes", cap) or cap)
    except Exception:
        pass
    return int(max(min(cap - 16 * 1024 * 1024, 100 * 1024 * 1024), 32 * 1024 * 1024))


# --------------------------------------------------------------------------- #
# Kernel A: LayerNorm1 + fused QKV projection (row-tiled, HBM-bandwidth bound)
# --------------------------------------------------------------------------- #
def _ln_qkv_kernel(x_ref, g1_ref, b1_ref, wqkv_ref, bqkv_ref, qkv_ref):
    x = x_ref[0]                                            # (tr, C) f32
    mu = jnp.mean(x, axis=-1, keepdims=True)
    var = jnp.mean(jnp.square(x - mu), axis=-1, keepdims=True)
    xn = (x - mu) * jax.lax.rsqrt(var + EPS) * g1_ref[0] + b1_ref[0]
    # bf16 MXU inputs, f32 accumulation.  Q-scale already folded into wqkv/bqkv.
    qkv = jnp.dot(xn.astype(jnp.bfloat16), wqkv_ref[...],
                  preferred_element_type=jnp.float32) + bqkv_ref[0]
    qkv_ref[0] = qkv.astype(qkv_ref.dtype)                  # bf16, lane-dense (tr, 3C)


# --------------------------------------------------------------------------- #
# Kernel B: flash attention + output proj + residual + LN2 + MLP(GELU) + residual
# --------------------------------------------------------------------------- #
def _attn_mlp_kernel(x_ref, q_ref, k_ref, v_ref,
                     wproj_ref, bproj_ref, g2_ref, b2_ref,
                     w1_ref, bb1_ref, w2_ref, bb2_ref,
                     out_ref,
                     m_sc, l_sc, acc_sc,
                     *, num_heads, head_dim):
    ki = pl.program_id(2)

    @pl.when(ki == 0)
    def _init():
        m_sc[...] = jnp.full(m_sc.shape, -jnp.inf, dtype=m_sc.dtype)
        l_sc[...] = jnp.zeros(l_sc.shape, l_sc.dtype)
        acc_sc[...] = jnp.zeros(acc_sc.shape, acc_sc.dtype)

    q = q_ref[0]          # (tq, C) bf16 — Q column group of packed qkv (pre-scaled)
    k = k_ref[0]          # (tk, C) bf16 — K column group
    v = v_ref[0]          # (tk, C) bf16 — V column group

    # Per-head flash update (static loop, nh small): live score/prob tile is (tq, tk).
    for h in range(num_heads):
        cols = slice(h * head_dim, (h + 1) * head_dim)
        qh, kh, vh = q[:, cols], k[:, cols], v[:, cols]
        # q @ k^T via dot_general contracting the head dims (no transpose materialized)
        s = jax.lax.dot_general(qh, kh, (((1,), (1,)), ((), ())),
                                preferred_element_type=jnp.float32)      # (tq, tk)
        m_prev = m_sc[h]                                                 # (tq, 1)
        m_new = jnp.maximum(m_prev, jnp.max(s, axis=-1, keepdims=True))
        alpha = jnp.exp(m_prev - m_new)
        # NOTE: exp kept in f32 for accuracy; bf16 exp (v6e/v7x EUP) is a further tweak.
        p = jnp.exp(s - m_new)
        l_sc[h] = alpha * l_sc[h] + jnp.sum(p, axis=-1, keepdims=True)
        acc_sc[h] = alpha * acc_sc[h] + jnp.dot(
            p.astype(v.dtype), vh, preferred_element_type=jnp.float32)   # (tq, hd)
        m_sc[h] = m_new

    @pl.when(ki == pl.num_programs(2) - 1)
    def _finalize():
        tq = q.shape[0]
        C = wproj_ref.shape[-1]
        # Head merge folded into the projection: per-head (tq, hd) @ (hd, C) MXU-
        # accumulated into a lane-dense f32 (tq, C) slab — no masked partial stores.
        attn = jnp.zeros((tq, C), jnp.float32)
        for h in range(num_heads):
            inv_l = pl.reciprocal(l_sc[h], approx=True)        # (tq, 1), EUP slot
            oh = (acc_sc[h] * inv_l).astype(jnp.bfloat16)      # (tq, hd)
            attn = attn + jnp.dot(oh, wproj_ref[h],
                                  preferred_element_type=jnp.float32)
        x1 = x_ref[0] + attn + bproj_ref[0]                    # f32 residual path

        # LayerNorm 2
        mu = jnp.mean(x1, axis=-1, keepdims=True)
        var = jnp.mean(jnp.square(x1 - mu), axis=-1, keepdims=True)
        x2n = (x1 - mu) * jax.lax.rsqrt(var + EPS) * g2_ref[0] + b2_ref[0]

        # MLP: Linear -> exact-erf GELU -> Linear (h1 only ever (tq, 4C))
        h1 = jnp.dot(x2n.astype(jnp.bfloat16), w1_ref[...],
                     preferred_element_type=jnp.float32) + bb1_ref[0]
        h1 = 0.5 * h1 * (1.0 + jax.lax.erf(h1 * (1.0 / math.sqrt(2.0))))
        h2 = jnp.dot(h1.astype(jnp.bfloat16), w2_ref[...],
                     preferred_element_type=jnp.float32) + bb2_ref[0]

        out_ref[0] = (x1 + h2).astype(out_ref.dtype)


# --------------------------------------------------------------------------- #
# Wrapper
# --------------------------------------------------------------------------- #
def transformer_encoder_block_3d(x, params, num_heads, *,
                                 row_tile=512, q_tile=256, kv_tile=128,
                                 single_buffer_weights=True):
    """x: (B, D, H, W, C) float32.  params: tuple of weight arrays (see init_params)."""
    B, D, H, W, C = x.shape
    N = D * H * W
    hd = C // num_heads
    assert hd * num_heads == C, "embed_dim must be divisible by num_heads"
    assert C % 128 == 0, "this kernel requires embed_dim to be a multiple of 128 lanes"
    scale = hd ** (-0.5)

    (g1, b1, wqkv, bqkv, wproj, bproj, g2, b2, w1, bb1, w2, bb2) = params

    # Fold the 1/sqrt(head_dim) attention scale into the Q columns of the qkv proj
    # (zero runtime cost; avoids an (N, N) VALU multiply later).
    wqkv_s = wqkv.at[:, :C].multiply(scale)
    bqkv_s = bqkv.at[:, :C].multiply(scale)

    # bf16 weights for the MXU; biases / LN params stay f32 (added after f32 accum).
    wqkv_b = wqkv_s.astype(jnp.bfloat16)
    # Output projection reshaped head-major (nh, hd, C): the kernel merges heads by
    # MXU-accumulating (tq, hd) @ (hd, C) per head straight from the accumulator.
    wproj_h = wproj.astype(jnp.bfloat16).reshape(num_heads, hd, C)
    w1_b = w1.astype(jnp.bfloat16)
    w2_b = w2.astype(jnp.bfloat16)

    xf = x.reshape(B, N, C)

    tr = min(row_tile, N)
    tq = min(q_tile, N)
    tk = min(kv_tile, N)
    # v7x megacore: make sure the 'parallel' grid extent B*(N//tq) feeds both TCs.
    while B * (N // tq) < 2 and tq > 8 and tq % 2 == 0 and N % (tq // 2) == 0:
        tq //= 2
    # TODO(synk): mask partial tiles instead of requiring tile-divisible D*H*W.
    assert N % tr == 0 and N % tq == 0 and N % tk == 0, "sequence must divide tiles"

    vmem_limit = _vmem_limit_bytes()
    q_tiles = N // tq

    def _forward(buffered):
        # Grid-invariant operands: constant index_map => DMA'd once; buffered=True
        # additionally single-buffers them (no 2x double-buffer VMEM footprint).
        def const2(shape):   # Kernel A (2 grid axes)
            kw = {"pipeline_mode": pl.Buffered(1)} if buffered else {}
            return pl.BlockSpec(shape, lambda b, r: (0,) * len(shape), **kw)

        def const3(shape):   # Kernel B (3 grid axes)
            kw = {"pipeline_mode": pl.Buffered(1)} if buffered else {}
            return pl.BlockSpec(shape, lambda b, qi, ki: (0,) * len(shape), **kw)

        # ---------------- Kernel A: LN1 + QKV ----------------
        cost_a = pl.CostEstimate(
            flops=2 * B * N * C * 3 * C + 10 * B * N * C,
            transcendentals=B * N,
            bytes_accessed=B * N * C * 4 + B * N * 3 * C * 2 + C * 3 * C * 2)
        qkv = pl.pallas_call(
            _ln_qkv_kernel,
            out_shape=jax.ShapeDtypeStruct((B, N, 3 * C), jnp.bfloat16),
            grid_spec=pltpu.PrefetchScalarGridSpec(
                num_scalar_prefetch=0,
                grid=(B, N // tr),
                in_specs=[
                    pl.BlockSpec((1, tr, C), lambda b, r: (b, r, 0)),
                    const2((1, C)), const2((1, C)),            # ln1 gamma, beta
                    const2((C, 3 * C)), const2((1, 3 * C)),    # qkv weight, bias
                ],
                out_specs=pl.BlockSpec((1, tr, 3 * C), lambda b, r: (b, r, 0)),
            ),
            compiler_params=pltpu.CompilerParams(
                dimension_semantics=("parallel", "parallel"),
                vmem_limit_bytes=vmem_limit),
            cost_estimate=cost_a,
        )(xf, g1, b1, wqkv_b, bqkv_s)

        # ---------------- Kernel B: flash attention + proj + LN2 + MLP ----------------
        # Q/K/V are read directly from the packed lane-dense (B, N, 3C) qkv tensor:
        # the last-axis block index (block size C) selects the Q / K / V column group,
        # so no XLA transposes and no lane-sparse (B, nh, N, hd) HBM copies exist.
        kernel = functools.partial(_attn_mlp_kernel, num_heads=num_heads, head_dim=hd)
        cost_b = pl.CostEstimate(
            flops=B * (4 * N * N * C + 2 * N * C * C + 16 * N * C * C),
            transcendentals=B * num_heads * N * N + B * N * 4 * C,
            bytes_accessed=(B * N * C * 4 * 2 + B * N * C * 2
                            + 2 * B * N * C * 2 * q_tiles
                            + (C * C + 8 * C * C) * 2))
        out = pl.pallas_call(
            kernel,
            out_shape=jax.ShapeDtypeStruct((B, N, C), x.dtype),
            grid_spec=pltpu.PrefetchScalarGridSpec(
                num_scalar_prefetch=0,
                grid=(B, N // tq, N // tk),
                in_specs=[
                    pl.BlockSpec((1, tq, C), lambda b, qi, ki: (b, qi, 0)),  # x (resid)
                    pl.BlockSpec((1, tq, C), lambda b, qi, ki: (b, qi, 0)),  # Q cols
                    pl.BlockSpec((1, tk, C), lambda b, qi, ki: (b, ki, 1)),  # K cols
                    pl.BlockSpec((1, tk, C), lambda b, qi, ki: (b, ki, 2)),  # V cols
                    const3((num_heads, hd, C)), const3((1, C)),   # proj W (head-major), b
                    const3((1, C)), const3((1, C)),               # ln2 gamma, beta
                    const3((C, 4 * C)), const3((1, 4 * C)),       # mlp lin1 W, b
                    const3((4 * C, C)), const3((1, C)),           # mlp lin2 W, b
                ],
                out_specs=pl.BlockSpec((1, tq, C), lambda b, qi, ki: (b, qi, 0)),
                scratch_shapes=[
                    pltpu.VMEM((num_heads, tq, 1), jnp.float32),   # m (running max)
                    pltpu.VMEM((num_heads, tq, 1), jnp.float32),   # l (running denom)
                    pltpu.VMEM((num_heads, tq, hd), jnp.float32),  # acc (running PV)
                ]),
            compiler_params=pltpu.CompilerParams(
                dimension_semantics=("parallel", "parallel", "arbitrary"),
                vmem_limit_bytes=vmem_limit),
            cost_estimate=cost_b,
        )(xf, qkv, qkv, qkv, wproj_h, bproj, g2, b2, w1_b, bb1, w2_b, bb2)
        return out

    if single_buffer_weights:
        try:
            out = _forward(True)
        except Exception:
            # Fallback for jax versions without BlockSpec.pipeline_mode support.
            out = _forward(False)
    else:
        out = _forward(False)

    return out.reshape(B, D, H, W, C)


# --------------------------------------------------------------------------- #
# Parameters & pure-JAX reference
# --------------------------------------------------------------------------- #
def init_params(key, embed_dim):
    """Linear weights stored in (in, out) layout so kernels right-multiply
    (y = x @ W + b), matching PyTorch's y = x @ W_pt.T + b."""
    C = embed_dim
    mlp_dim = 4 * C
    ks = jax.random.split(key, 8)
    s = 0.02
    g1 = jnp.ones((1, C), jnp.float32)
    b1 = jnp.zeros((1, C), jnp.float32)
    wqkv = s * jax.random.normal(ks[0], (C, 3 * C), jnp.float32)
    bqkv = s * jax.random.normal(ks[1], (1, 3 * C), jnp.float32)
    wproj = s * jax.random.normal(ks[2], (C, C), jnp.float32)
    bproj = s * jax.random.normal(ks[3], (1, C), jnp.float32)
    g2 = jnp.ones((1, C), jnp.float32)
    b2 = jnp.zeros((1, C), jnp.float32)
    w1 = s * jax.random.normal(ks[4], (C, mlp_dim), jnp.float32)
    bb1 = s * jax.random.normal(ks[5], (1, mlp_dim), jnp.float32)
    w2 = s * jax.random.normal(ks[6], (mlp_dim, C), jnp.float32)
    bb2 = s * jax.random.normal(ks[7], (1, C), jnp.float32)
    return (g1, b1, wqkv, bqkv, wproj, bproj, g2, b2, w1, bb1, w2, bb2)


def reference_block(x, params, num_heads):
    """Pure-JAX f32 reference mirroring the PyTorch forward (dropout p=0 => no-op)."""
    (g1, b1, wqkv, bqkv, wproj, bproj, g2, b2, w1, bb1, w2, bb2) = params
    B, D, H, W, C = x.shape
    N = D * H * W
    hd = C // num_heads
    xf = x.reshape(B, N, C)

    def ln(z, g, b):
        mu = jnp.mean(z, -1, keepdims=True)
        var = jnp.mean(jnp.square(z - mu), -1, keepdims=True)
        return (z - mu) * jax.lax.rsqrt(var + EPS) * g[0] + b[0]

    xn = ln(xf, g1, b1)
    qkv = xn @ wqkv + bqkv[0]
    qkv = qkv.reshape(B, N, 3, num_heads, hd).transpose(2, 0, 3, 1, 4)
    q, k, v = qkv[0], qkv[1], qkv[2]
    attn = jnp.einsum('bhqd,bhkd->bhqk', q, k) * (hd ** -0.5)
    attn = jax.nn.softmax(attn, axis=-1)
    o = jnp.einsum('bhqk,bhkd->bhqd', attn, v)
    o = o.transpose(0, 2, 1, 3).reshape(B, N, C)
    o = o @ wproj + bproj[0]
    x1 = xf + o

    x2n = ln(x1, g2, b2)
    h1 = x2n @ w1 + bb1[0]
    h1 = 0.5 * h1 * (1.0 + jax.lax.erf(h1 / jnp.sqrt(2.0)))
    h2 = h1 @ w2 + bb2[0]
    return (x1 + h2).reshape(B, D, H, W, C)


if __name__ == "__main__":
    # Small but lane-dense demo: C=128 (multiple of 128 lanes), N = 2*4*4 = 32.
    B, D, H, W = 2, 2, 4, 4
    embed_dim, num_heads = 128, 4

    key = jax.random.PRNGKey(0)
    kx, kp = jax.random.split(key)
    x = jax.random.normal(kx, (B, D, H, W, embed_dim), jnp.float32)
    params = init_params(kp, embed_dim)

    out = transformer_encoder_block_3d(x, params, num_heads)
    out = jax.block_until_ready(out)

    ref = reference_block(x, params, num_heads)
    assert out.shape == (B, D, H, W, embed_dim)
    # bf16 matmul inputs (f32 accumulation) + approx reciprocal => loosened tolerance.
    assert jnp.allclose(out, ref, atol=2e-2, rtol=2e-2), "mismatch vs reference"

    print("KERNEL_OK")
</pallas_src>

<mosaic_0001>
module attributes {stable_mosaic.version = 11 : i64} {
  func.func @_ln_qkv_kernel(%arg0: i32, %arg1: i32, %arg2: memref<1x32x128xf32, #tpu.memory_space<vmem>>, %arg3: memref<1x128xf32, #tpu.memory_space<vmem>>, %arg4: memref<1x128xf32, #tpu.memory_space<vmem>>, %arg5: memref<128x384xbf16, #tpu.memory_space<vmem>>, %arg6: memref<1x384xf32, #tpu.memory_space<vmem>>, %arg7: memref<1x32x384xbf16, #tpu.memory_space<vmem>>) attributes {dimension_semantics = [#tpu.dimension_semantics<parallel>, #tpu.dimension_semantics<parallel>], iteration_bounds = array<i64: 2, 1>, scalar_prefetch = 0 : i64, scratch_operands = 0 : i64, tpu.core_type = #tpu.core_type<tc>, window_params = [{transform_indices = @transform_0, window_bounds = array<i64: 1, 32, 128>}, {pipeline_mode = #tpu.pipeline_mode<synchronous>, transform_indices = @transform_1, window_bounds = array<i64: 1, 128>}, {pipeline_mode = #tpu.pipeline_mode<synchronous>, transform_indices = @transform_2, window_bounds = array<i64: 1, 128>}, {pipeline_mode = #tpu.pipeline_mode<synchronous>, transform_indices = @transform_3, window_bounds = array<i64: 128, 384>}, {pipeline_mode = #tpu.pipeline_mode<synchronous>, transform_indices = @transform_4, window_bounds = array<i64: 1, 384>}, {transform_indices = @transform_5, window_bounds = array<i64: 1, 32, 384>}]} {
    %c0 = arith.constant 0 : index
    %c0_0 = arith.constant 0 : index
    %c0_1 = arith.constant 0 : index
    %0 = vector.load %arg2[%c0, %c0_0, %c0_1] : memref<1x32x128xf32, #tpu.memory_space<vmem>>, vector<1x32x128xf32>
    %1 = vector.shape_cast %0 : vector<1x32x128xf32> to vector<32x128xf32>
    %cst = arith.constant dense<0.000000e+00> : vector<32xf32>
    %2 = vector.multi_reduction <add>, %1, %cst [1] : vector<32x128xf32> to vector<32xf32>
    %3 = vector.shape_cast %2 : vector<32xf32> to vector<32x1xf32>
    %cst_2 = arith.constant 1.280000e+02 : f32
    %4 = vector.broadcast %cst_2 : f32 to vector<32x1xf32>
    %5 = arith.divf %3, %4 : vector<32x1xf32>
    %6 = vector.broadcast %5 : vector<32x1xf32> to vector<32x128xf32>
    %7 = arith.subf %1, %6 : vector<32x128xf32>
    %8 = arith.mulf %7, %7 : vector<32x128xf32>
    %cst_3 = arith.constant dense<0.000000e+00> : vector<32xf32>
    %9 = vector.multi_reduction <add>, %8, %cst_3 [1] : vector<32x128xf32> to vector<32xf32>
    %10 = vector.shape_cast %9 : vector<32xf32> to vector<32x1xf32>
    %cst_4 = arith.constant 1.280000e+02 : f32
    %11 = vector.broadcast %cst_4 : f32 to vector<32x1xf32>
    %12 = arith.divf %10, %11 : vector<32x1xf32>
    %13 = vector.broadcast %5 : vector<32x1xf32> to vector<32x128xf32>
    %14 = arith.subf %1, %13 : vector<32x128xf32>
    %cst_5 = arith.constant 9.99999974E-6 : f32
    %15 = vector.broadcast %cst_5 : f32 to vector<32x1xf32>
    %16 = arith.addf %12, %15 : vector<32x1xf32>
    %17 = math.rsqrt %16 : vector<32x1xf32>
    %18 = vector.broadcast %17 : vector<32x1xf32> to vector<32x128xf32>
    %19 = arith.mulf %14, %18 : vector<32x128xf32>
    %c0_6 = arith.constant 0 : index
    %c0_7 = arith.constant 0 : index
    %20 = vector.load %arg3[%c0_6, %c0_7] : memref<1x128xf32, #tpu.memory_space<vmem>>, vector<1x128xf32>
    %21 = vector.shape_cast %20 : vector<1x128xf32> to vector<128xf32>
    %22 = vector.shape_cast %21 : vector<128xf32> to vector<1x128xf32>
    %23 = vector.broadcast %22 : vector<1x128xf32> to vector<32x128xf32>
    %24 = arith.mulf %19, %23 : vector<32x128xf32>
    %c0_8 = arith.constant 0 : index
    %c0_9 = arith.constant 0 : index
    %25 = vector.load %arg4[%c0_8, %c0_9] : memref<1x128xf32, #tpu.memory_space<vmem>>, vector<1x128xf32>
    %26 = vector.shape_cast %25 : vector<1x128xf32> to vector<128xf32>
    %27 = vector.shape_cast %26 : vector<128xf32> to vector<1x128xf32>
    %28 = vector.broadcast %27 : vector<1x128xf32> to vector<32x128xf32>
    %29 = arith.addf %24, %28 : vector<32x128xf32>
    %30 = arith.truncf %29 : vector<32x128xf32> to vector<32x128xbf16>
    %c0_10 = arith.constant 0 : index
    %c0_11 = arith.constant 0 : index
    %31 = vector.load %arg5[%c0_10, %c0_11] : memref<128x384xbf16, #tpu.memory_space<vmem>>, vector<128x384xbf16>
    %cst_12 = arith.constant dense<0.000000e+00> : vector<32x384xf32>
    %32 = tpu.matmul %30, %31, %cst_12 {dimension_numbers = #tpu.dot_dimension_numbers<[1], [0], [0], [1], [0, 0, 1, 1], [], []>} : vector<32x128xbf16>, vector<128x384xbf16>, vector<32x384xf32> -> vector<32x384xf32>
    %c0_13 = arith.constant 0 : index
    %c0_14 = arith.constant 0 : index
    %33 = vector.load %arg6[%c0_13, %c0_14] : memref<1x384xf32, #tpu.memory_space<vmem>>, vector<1x384xf32>
    %34 = vector.shape_cast %33 : vector<1x384xf32> to vector<384xf32>
    %35 = vector.shape_cast %34 : vector<384xf32> to vector<1x384xf32>
    %36 = vector.broadcast %35 : vector<1x384xf32> to vector<32x384xf32>
    %37 = arith.addf %32, %36 : vector<32x384xf32>
    %38 = arith.truncf %37 : vector<32x384xf32> to vector<32x384xbf16>
    %c0_15 = arith.constant 0 : index
    %c0_16 = arith.constant 0 : index
    %c0_17 = arith.constant 0 : index
    %39 = vector.load %arg7[%c0_15, %c0_16, %c0_17] : memref<1x32x384xbf16, #tpu.memory_space<vmem>>, vector<1x32x384xbf16>
    %40 = vector.shape_cast %39 : vector<1x32x384xbf16> to vector<32x384xbf16>
    %41 = vector.shape_cast %38 : vector<32x384xbf16> to vector<1x32x384xbf16>
    tpu.vector_store %arg7[%c0_15, %c0_16, %c0_17], %41 {strides = array<i32>} : memref<1x32x384xbf16, #tpu.memory_space<vmem>>, vector<1x32x384xbf16>,
    return
  }
  func.func @transform_0(%arg0: i32, %arg1: i32) -> (i32, i32, i32) {
    %c0_i32 = arith.constant 0 : i32
    %c0_i32_0 = arith.constant 0 : i32
    return %arg0, %arg1, %c0_i32 : i32, i32, i32
  }
  func.func @transform_1(%arg0: i32, %arg1: i32) -> (i32, i32) {
    %c0_i32 = arith.constant 0 : i32
    %c0_i32_0 = arith.constant 0 : i32
    %c0_i32_1 = arith.constant 0 : i32
    return %c0_i32, %c0_i32_0 : i32, i32
  }
  func.func @transform_2(%arg0: i32, %arg1: i32) -> (i32, i32) {
    %c0_i32 = arith.constant 0 : i32
    %c0_i32_0 = arith.constant 0 : i32
    %c0_i32_1 = arith.constant 0 : i32
    return %c0_i32, %c0_i32_0 : i32, i32
  }
  func.func @transform_3(%arg0: i32, %arg1: i32) -> (i32, i32) {
    %c0_i32 = arith.constant 0 : i32
    %c0_i32_0 = arith.constant 0 : i32
    %c0_i32_1 = arith.constant 0 : i32
    return %c0_i32, %c0_i32_0 : i32, i32
  }
  func.func @transform_4(%arg0: i32, %arg1: i32) -> (i32, i32) {
    %c0_i32 = arith.constant 0 : i32
    %c0_i32_0 = arith.constant 0 : i32
    %c0_i32_1 = arith.constant 0 : i32
    return %c0_i32, %c0_i32_0 : i32, i32
  }
  func.func @transform_5(%arg0: i32, %arg1: i32) -> (i32, i32, i32) {
    %c0_i32 = arith.constant 0 : i32
    %c0_i32_0 = arith.constant 0 : i32
    return %arg0, %arg1, %c0_i32 : i32, i32, i32
  }
}

module attributes {stable_mosaic.version = 11 : i64} {
  func.func @_ln_qkv_kernel(%arg0: i32, %arg1: i32, %arg2: memref<1x32x128xf32, #tpu.memory_space<vmem>>, %arg3: memref<1x128xf32, #tpu.memory_space<vmem>>, %arg4: memref<1x128xf32, #tpu.memory_space<vmem>>, %arg5: memref<128x384xbf16, #tpu.memory_space<vmem>>, %arg6: memref<1x384xf32, #tpu.memory_space<vmem>>, %arg7: memref<1x32x384xbf16, #tpu.memory_space<vmem>>) attributes {dimension_semantics = [#tpu.dimension_semantics<parallel>, #tpu.dimension_semantics<parallel>], iteration_bounds = array<i64: 2, 1>, scalar_prefetch = 0 : i64, scratch_operands = 0 : i64, tpu.core_type = #tpu.core_type<tc>, window_params = [{transform_indices = @transform_0, window_bounds = array<i64: 1, 32, 128>}, {pipeline_mode = #tpu.pipeline_mode<synchronous>, transform_indices = @transform_1, window_bounds = array<i64: 1, 128>}, {pipeline_mode = #tpu.pipeline_mode<synchronous>, transform_indices = @transform_2, window_bounds = array<i64: 1, 128>}, {pipeline_mode = #tpu.pipeline_mode<synchronous>, transform_indices = @transform_3, window_bounds = array<i64: 128, 384>}, {pipeline_mode = #tpu.pipeline_mode<synchronous>, transform_indices = @transform_4, window_bounds = array<i64: 1, 384>}, {transform_indices = @transform_5, window_bounds = array<i64: 1, 32, 384>}]} {
    %c0 = arith.constant 0 : index
    %c0_0 = arith.constant 0 : index
    %c0_1 = arith.constant 0 : index
    %0 = vector.load %arg2[%c0, %c0_0, %c0_1] : memref<1x32x128xf32, #tpu.memory_space<vmem>>, vector<1x32x128xf32>
    %1 = vector.shape_cast %0 : vector<1x32x128xf32> to vector<32x128xf32>
    %cst = arith.constant dense<0.000000e+00> : vector<32xf32>
    %2 = vector.multi_reduction <add>, %1, %cst [1] : vector<32x128xf32> to vector<32xf32>
    %3 = vector.shape_cast %2 : vector<32xf32> to vector<32x1xf32>
    %cst_2 = arith.constant 1.280000e+02 : f32
    %4 = vector.broadcast %cst_2 : f32 to vector<32x1xf32>
    %5 = arith.divf %3, %4 : vector<32x1xf32>
    %6 = vector.broadcast %5 : vector<32x1xf32> to vector<32x128xf32>
    %7 = arith.subf %1, %6 : vector<32x128xf32>
    %8 = arith.mulf %7, %7 : vector<32x128xf32>
    %cst_3 = arith.constant dense<0.000000e+00> : vector<32xf32>
    %9 = vector.multi_reduction <add>, %8, %cst_3 [1] : vector<32x128xf32> to vector<32xf32>
    %10 = vector.shape_cast %9 : vector<32xf32> to vector<32x1xf32>
    %cst_4 = arith.constant 1.280000e+02 : f32
    %11 = vector.broadcast %cst_4 : f32 to vector<32x1xf32>
    %12 = arith.divf %10, %11 : vector<32x1xf32>
    %13 = vector.broadcast %5 : vector<32x1xf32> to vector<32x128xf32>
    %14 = arith.subf %1, %13 : vector<32x128xf32>
    %cst_5 = arith.constant 9.99999974E-6 : f32
    %15 = vector.broadcast %cst_5 : f32 to vector<32x1xf32>
    %16 = arith.addf %12, %15 : vector<32x1xf32>
    %17 = math.rsqrt %16 : vector<32x1xf32>
    %18 = vector.broadcast %17 : vector<32x1xf32> to vector<32x128xf32>
    %19 = arith.mulf %14, %18 : vector<32x128xf32>
    %c0_6 = arith.constant 0 : index
    %c0_7 = arith.constant 0 : index
    %20 = vector.load %arg3[%c0_6, %c0_7] : memref<1x128xf32, #tpu.memory_space<vmem>>, vector<1x128xf32>
    %21 = vector.shape_cast %20 : vector<1x128xf32> to vector<128xf32>
    %22 = vector.shape_cast %21 : vector<128xf32> to vector<1x128xf32>
    %23 = vector.broadcast %22 : vector<1x128xf32> to vector<32x128xf32>
    %24 = arith.mulf %19, %23 : vector<32x128xf32>
    %c0_8 = arith.constant 0 : index
    %c0_9 = arith.constant 0 : index
    %25 = vector.load %arg4[%c0_8, %c0_9] : memref<1x128xf32, #tpu.memory_space<vmem>>, vector<1x128xf32>
    %26 = vector.shape_cast %25 : vector<1x128xf32> to vector<128xf32>
    %27 = vector.shape_cast %26 : vector<128xf32> to vector<1x128xf32>
    %28 = vector.broadcast %27 : vector<1x128xf32> to vector<32x128xf32>
    %29 = arith.addf %24, %28 : vector<32x128xf32>
    %30 = arith.truncf %29 : vector<32x128xf32> to vector<32x128xbf16>
    %c0_10 = arith.constant 0 : index
    %c0_11 = arith.constant 0 : index
    %31 = vector.load %arg5[%c0_10, %c0_11] : memref<128x384xbf16, #tpu.memory_space<vmem>>, vector<128x384xbf16>
    %cst_12 = arith.constant dense<0.000000e+00> : vector<32x384xf32>
    %32 = tpu.matmul %30, %31, %cst_12 {dimension_numbers = #tpu.dot_dimension_numbers<[1], [0], [0], [1], [0, 0, 1, 1], [], []>} : vector<32x128xbf16>, vector<128x384xbf16>, vector<32x384xf32> -> vector<32x384xf32>
    %c0_13 = arith.constant 0 : index
    %c0_14 = arith.constant 0 : index
    %33 = vector.load %arg6[%c0_13, %c0_14] : memref<1x384xf32, #tpu.memory_space<vmem>>, vector<1x384xf32>
    %34 = vector.shape_cast %33 : vector<1x384xf32> to vector<384xf32>
    %35 = vector.shape_cast %34 : vector<384xf32> to vector<1x384xf32>
    %36 = vector.broadcast %35 : vector<1x384xf32> to vector<32x384xf32>
    %37 = arith.addf %32, %36 : vector<32x384xf32>
    %38 = arith.truncf %37 : vector<32x384xf32> to vector<32x384xbf16>
    %c0_15 = arith.constant 0 : index
    %c0_16 = arith.constant 0 : index
    %c0_17 = arith.constant 0 : index
    %39 = vector.load %arg7[%c0_15, %c0_16, %c0_17] : memref<1x32x384xbf16, #tpu.memory_space<vmem>>, vector<1x32x384xbf16>
    %40 = vector.shape_cast %39 : vector<1x32x384xbf16> to vector<32x384xbf16>
    %41 = vector.shape_cast %38 : vector<32x384xbf16> to vector<1x32x384xbf16>
    tpu.vector_store %arg7[%c0_15, %c0_16, %c0_17], %41 {strides = array<i32>} : memref<1x32x384xbf16, #tpu.memory_space<vmem>>, vector<1x32x384xbf16>,
    return
  }
  func.func @transform_0(%arg0: i32, %arg1: i32) -> (i32, i32, i32) {
    %c0_i32 = arith.constant 0 : i32
    %c0_i32_0 = arith.constant 0 : i32
    return %arg0, %arg1, %c0_i32 : i32, i32, i32
  }
  func.func @transform_1(%arg0: i32, %arg1: i32) -> (i32, i32) {
    %c0_i32 = arith.constant 0 : i32
    %c0_i32_0 = arith.constant 0 : i32
    %c0_i32_1 = arith.constant 0 : i32
    return %c0_i32, %c0_i32_0 : i32, i32
  }
  func.func @transform_2(%arg0: i32, %arg1: i32) -> (i32, i32) {
    %c0_i32 = arith.constant 0 : i32
    %c0_i32_0 = arith.constant 0 : i32
    %c0_i32_1 = arith.constant 0 : i32
    return %c0_i32, %c0_i32_0 : i32, i32
  }
  func.func @transform_3(%arg0: i32, %arg1: i32) -> (i32, i32) {
    %c0_i32 = arith.constant 0 : i32
    %c0_i32_0 = arith.constant 0 : i32
    %c0_i32_1 = arith.constant 0 : i32
    return %c0_i32, %c0_i32_0 : i32, i32
  }
  func.func @transform_4(%arg0: i32, %arg1: i32) -> (i32, i32) {
    %c0_i32 = arith.constant 0 : i32
    %c0_i32_0 = arith.constant 0 : i32
    %c0_i32_1 = arith.constant 0 : i32
    return %c0_i32, %c0_i32_0 : i32, i32
  }
  func.func @transform_5(%arg0: i32, %arg1: i32) -> (i32, i32, i32) {
    %c0_i32 = arith.constant 0 : i32
    %c0_i32_0 = arith.constant 0 : i32
    return %arg0, %arg1, %c0_i32 : i32, i32, i32
  }
}

</mosaic_0001>

<llo_original>
// kernel: tpu_custom_call.1
$region0: #{tpu_custom_call.1}
  #allocation0 [shape = 'u32[]', space=smem, size = 0x4, offset = 0x4, fixed_abs, tag = 'smem constant byte address 0x4 - core index']
  #allocation1 [shape = 'u32[144,128]{1,0:T(1,128)}', space=vmem, size = 0x12000, scoped, tag = 'internal scratch']
  %s0 = inlined_call_operand.hbm [shape: f32[2,32,128], index: 0, kind: input, shape index: {}]
  %s1 = inlined_call_operand.vmem [shape: f32[1,128], index: 1, kind: input, shape index: {}]
  %s2 = inlined_call_operand.vmem [shape: f32[1,128], index: 2, kind: input, shape index: {}]
  %s3 = inlined_call_operand.hbm [shape: bf16[128,384], index: 3, kind: input, shape index: {}]
  %s4 = inlined_call_operand.vmem [shape: f32[1,384], index: 4, kind: input, shape index: {}]
  %s5 = inlined_call_operand.hbm [shape: bf16[2,32,384], index: 5, kind: output, shape index: {}]
  %s6 = sld [smem:[#allocation0]]
  $region61: #{tpu_custom_call.1} parent=0
    _
  %s8 = ssub.s32 1, %s6
  %s9 = scalar_select 0, %s8, %s6
  $region1: #{tpu_custom_call.1} parent=0
    #allocation2 [shape = 'u8[32768]{0}', space=vmem, size = 0x8000, scoped, tag = 'input window, operand 0']
    #allocation3 [shape = 's32[2]{0}', space=sflag, size = 0x8, scoped, tag = 'scoped memory for tpu_custom_call.1']
    #allocation4 [shape = 's32[2]{0}', space=sflag, size = 0x8, scoped, tag = 'scoped memory for tpu_custom_call.1']
    #allocation5 [shape = 'u8[98304]{0}', space=vmem, size = 0x18000, scoped, tag = 'input window, operand 3, single buffered']
    #allocation6 [shape = 's32[1]{0}', space=sflag, size = 0x4, scoped, tag = 'scoped memory for tpu_custom_call.1']
    #allocation7 [shape = 'u8[49152]{0}', space=vmem, size = 0xc000, scoped, tag = 'output window, operand 0']
    %10 = vsyncpa [#allocation3], 0
    %s11 = scalar_lea.sflag [#allocation3], 1
    %12 = vsyncpa %s11, 0
    %13 = vsyncpa [#allocation6], 0
    %14 = vsyncpa [#allocation4], 0
    %s15 = scalar_lea.sflag [#allocation4], 1
    %16 = vsyncpa %s15, 0
    loop: start=0, step=1, limit=4
    $region2: #{tpu_custom_call.1} parent=1 // loop_pre_header
      _
    $region3: #{tpu_custom_call.1} parent=1 // loop_header
      %s18 = sphi 0, %s22
      %p19 = scmp.ge.s32.totalorder %s18, 4
      %s25 = sphi 0, %s37
      %s26 = sphi 0, %s33
      %s27 = sphi 0, %s25
      %s28 = sphi 0, %s26
      %s29 = sphi 0, %s27
      %s30 = sphi 0, %s28
      %s42 = sphi 0, %s44
      %s45 = sphi 0, %s42
      %s46 = sphi 0, %s45
      %s62 = sphi 0, %s46
      %s66 = sphi 0, %s66
      %s68 = sphi 0, %s66
      %s69 = sphi 0, %s68
      %s83 = sphi 0, %s69
      %s87 = sphi 0, %s87
      %s89 = sphi 0, %s87
      %s90 = sphi 0, %s89
      %s104 = sphi 0, %s90
      %s108 = sphi 0, %s108
      %s110 = sphi 0, %s108
      %s111 = sphi 0, %s110
      %s125 = sphi 0, %s111
      %s129 = sphi 0, %s129
      %s131 = sphi 0, %s129
      %s132 = sphi 0, %s131
      %s146 = sphi 0, %s132
      %s154 = sphi 0, %s156
      %s157 = sphi 0, %s154
      %s158 = sphi 0, %s157
      %s174 = sphi 0, %s158
    $region4: #{tpu_custom_call.1} parent=1 // loop_header_branch
      %21 = sbr.rel (%p19) target = $region8
    $region5: #{tpu_custom_call.1} parent=1 // loop_body
      %s23 = ssub.s32 %s18, 1
      %s24 = ssub.s32 %s18, 2
      %s31 = sadd.s32 1, %s26
      %p32 = scmp.ge.s32.totalorder %s31, 1
      %s33 = scalar_select %p32, 0, %s31
      %s34 = sadd.s32 1, %s25
      %s35 = scalar_select %p32, %s34, %s25
      %p36 = scmp.ge.s32.totalorder %s35, 2
      %s37 = scalar_select %p36, 0, %s35
      %s38 = ssub.s32 %s25, %s37
      %s39 = ssub.s32 %s26, %s33
      %s40 = sor.u32 %s38, %s39
      %p41 = scmp.eq.s32.totalorder %s40, 0
      %s43 = sadd.s32 %s42, 1
      %s44 = scalar_select %p41, %s42, %s43
      %p47 = pneg %p41
      %p48 = scmp.eq.s32.totalorder %s18, 1
      %p49 = por %p47, %p48
      %p50 = scmp.ne.s32.totalorder %s42, %s45
      %p51 = scmp.eq.s32.totalorder %s18, 0
      %p52 = por %p50, %p51
      %p53 = scmp.ne.s32.totalorder %s42, %s45
      %p54 = scmp.eq.s32.totalorder %s23, 1
      %p55 = por %p53, %p54
      %p56 = scmp.ne.s32.totalorder %s45, %s46
      %p57 = scmp.eq.s32.totalorder %s23, 0
      %p58 = por %p56, %p57
      %p59 = scmp.ne.s32.totalorder %s45, %s46
      %p60 = scmp.eq.s32.totalorder %s24, 1
      %p61 = por %p59, %p60
      %p63 = scmp.ne.s32.totalorder %s46, %s62
      %p64 = scmp.eq.s32.totalorder %s24, 0
      %p65 = por %p63, %p64
      %s67 = sadd.s32 %s66, 1
      %p70 = scmp.eq.s32.totalorder %s18, 1
      %p71 = scmp.ne.s32.totalorder %s66, %s68
      %p72 = scmp.eq.s32.totalorder %s18, 0
      %p73 = por %p71, %p72
      %p74 = scmp.ne.s32.totalorder %s66, %s68
      %p75 = scmp.eq.s32.totalorder %s23, 1
      %p76 = por %p74, %p75
      %p77 = scmp.ne.s32.totalorder %s68, %s69
      %p78 = scmp.eq.s32.totalorder %s23, 0
      %p79 = por %p77, %p78
      %p80 = scmp.ne.s32.totalorder %s68, %s69
      %p81 = scmp.eq.s32.totalorder %s24, 1
      %p82 = por %p80, %p81
      %p84 = scmp.ne.s32.totalorder %s69, %s83
      %p85 = scmp.eq.s32.totalorder %s24, 0
      %p86 = por %p84, %p85
      %s88 = sadd.s32 %s87, 1
      %p91 = scmp.eq.s32.totalorder %s18, 1
      %p92 = scmp.ne.s32.totalorder %s87, %s89
      %p93 = scmp.eq.s32.totalorder %s18, 0
      %p94 = por %p92, %p93
      %p95 = scmp.ne.s32.totalorder %s87, %s89
      %p96 = scmp.eq.s32.totalorder %s23, 1
      %p97 = por %p95, %p96
      %p98 = scmp.ne.s32.totalorder %s89, %s90
      %p99 = scmp.eq.s32.totalorder %s23, 0
      %p100 = por %p98, %p99
      %p101 = scmp.ne.s32.totalorder %s89, %s90
      %p102 = scmp.eq.s32.totalorder %s24, 1
      %p103 = por %p101, %p102
      %p105 = scmp.ne.s32.totalorder %s90, %s104
      %p106 = scmp.eq.s32.totalorder %s24, 0
      %p107 = por %p105, %p106
      %s109 = sadd.s32 %s108, 1
      %p112 = scmp.eq.s32.totalorder %s18, 1
      %p113 = scmp.ne.s32.totalorder %s108, %s110
      %p114 = scmp.eq.s32.totalorder %s18, 0
      %p115 = por %p113, %p114
      %p116 = scmp.ne.s32.totalorder %s108, %s110
      %p117 = scmp.eq.s32.totalorder %s23, 1
      %p118 = por %p116, %p117
      %p119 = scmp.ne.s32.totalorder %s110, %s111
      %p120 = scmp.eq.s32.totalorder %s23, 0
      %p121 = por %p119, %p120
      %p122 = scmp.ne.s32.totalorder %s110, %s111
      %p123 = scmp.eq.s32.totalorder %s24, 1
      %p124 = por %p122, %p123
      %p126 = scmp.ne.s32.totalorder %s111, %s125
      %p127 = scmp.eq.s32.totalorder %s24, 0
      %p128 = por %p126, %p127
      %s130 = sadd.s32 %s129, 1
      %p133 = scmp.eq.s32.totalorder %s18, 1
      %p134 = scmp.ne.s32.totalorder %s129, %s131
      %p135 = scmp.eq.s32.totalorder %s18, 0
      %p136 = por %p134, %p135
      %p137 = scmp.ne.s32.totalorder %s129, %s131
      %p138 = scmp.eq.s32.totalorder %s23, 1
      %p139 = por %p137, %p138
      %p140 = scmp.ne.s32.totalorder %s131, %s132
      %p141 = scmp.eq.s32.totalorder %s23, 0
      %p142 = por %p140, %p141
      %p143 = scmp.ne.s32.totalorder %s131, %s132
      %p144 = scmp.eq.s32.totalorder %s24, 1
      %p145 = por %p143, %p144
      %p147 = scmp.ne.s32.totalorder %s132, %s146
      %p148 = scmp.eq.s32.totalorder %s24, 0
      %p149 = por %p147, %p148
      %s150 = ssub.s32 %s25, %s37
      %s151 = ssub.s32 %s26, %s33
      %s152 = sor.u32 %s150, %s151
      %p153 = scmp.eq.s32.totalorder %s152, 0
      %s155 = sadd.s32 %s154, 1
      %s156 = scalar_select %p153, %s154, %s155
      %p159 = pneg %p153
      %p160 = scmp.eq.s32.totalorder %s18, 1
      %p161 = por %p159, %p160
      %p162 = scmp.ne.s32.totalorder %s154, %s157
      %p163 = scmp.eq.s32.totalorder %s18, 0
      %p164 = por %p162, %p163
      %p165 = scmp.ne.s32.totalorder %s154, %s157
      %p166 = scmp.eq.s32.totalorder %s23, 1
      %p167 = por %p165, %p166
      %p168 = scmp.ne.s32.totalorder %s157, %s158
      %p169 = scmp.eq.s32.totalorder %s23, 0
      %p170 = por %p168, %p169
      %p171 = scmp.ne.s32.totalorder %s157, %s158
      %p172 = scmp.eq.s32.totalorder %s24, 1
      %p173 = por %p171, %p172
      %p175 = scmp.ne.s32.totalorder %s158, %s174
      %p176 = scmp.eq.s32.totalorder %s24, 0
      %p177 = por %p175, %p176
      %p178 = scmp.le.s32.totalorder 1, %s18
      %p179 = scmp.lt.s32.totalorder %s18, 3
      %p180 = pnand %p178, %p179
      %p181 = pneg %p180
      // Predicated region
      $region9: #{tpu_custom_call.1} parent=5 // pred_check
        _
      $region10: #{tpu_custom_call.1} parent=5 // pred_check_branch
        %183 = sbr.rel (%p180) target = $region12
      $region11: #{tpu_custom_call.1} parent=5 // pred_region
        %s184 = ssub.s32 %s18, 1
        // Predicated region
        $region13: #{tpu_custom_call.1} parent=11 // pred_check
          %p185 = pneg %p79
        $region14: #{tpu_custom_call.1} parent=11 // pred_check_branch
          %187 = sbr.rel (%p185) target = $region16
        $region15: #{tpu_custom_call.1} parent=11 // pred_region
          _
        $region16: #{tpu_custom_call.1} parent=11 // pred_fallthru
          _
        // Predicated region
        $region17: #{tpu_custom_call.1} parent=11 // pred_check
          %p188 = pneg %p100
        $region18: #{tpu_custom_call.1} parent=11 // pred_check_branch
          %190 = sbr.rel (%p188) target = $region20
        $region19: #{tpu_custom_call.1} parent=11 // pred_region
          _
        $region20: #{tpu_custom_call.1} parent=11 // pred_fallthru
          _
        // Predicated region
        $region21: #{tpu_custom_call.1} parent=11 // pred_check
          %p191 = pneg %p121
        $region22: #{tpu_custom_call.1} parent=11 // pred_check_branch
          %193 = sbr.rel (%p191) target = $region24
        $region23: #{tpu_custom_call.1} parent=11 // pred_region
          %s195 = ssub.s32 3072, 3072
          %196 = vsyncadd [#allocation6], %s195
          %s197 = sshll.u32 [#allocation5], 4
          %s198 = int_to_ptr.vmem [resolvable:$true] %s197
          %203 = dma.hbm_to_vmem [thread:$0]  %s3, 3072, %s198, [#allocation6], 192, 192, 12
        $region24: #{tpu_custom_call.1} parent=11 // pred_fallthru
          _
        // Predicated region
        $region25: #{tpu_custom_call.1} parent=11 // pred_check
          %p204 = pneg %p142
        $region26: #{tpu_custom_call.1} parent=11 // pred_check_branch
          %206 = sbr.rel (%p204) target = $region28
        $region27: #{tpu_custom_call.1} parent=11 // pred_region
          _
        $region28: #{tpu_custom_call.1} parent=11 // pred_fallthru
          _
      $region12: #{tpu_custom_call.1} parent=5 // pred_fallthru
        _
      %p207 = scmp.lt.s32.totalorder %s18, 2
      // Predicated region
      $region29: #{tpu_custom_call.1} parent=5 // pred_check
        %p208 = pneg %p207
      $region30: #{tpu_custom_call.1} parent=5 // pred_check_branch
        %210 = sbr.rel (%p208) target = $region32
      $region31: #{tpu_custom_call.1} parent=5 // pred_region
        // Predicated region
        $region33: #{tpu_custom_call.1} parent=31 // pred_check
          %p211 = pneg %p52
        $region34: #{tpu_custom_call.1} parent=31 // pred_check_branch
          %213 = sbr.rel (%p211) target = $region36
        $region35: #{tpu_custom_call.1} parent=31 // pred_region
          %s214 = sand.u32 %s42, 1
          %s215 = scalar_lea.sflag [#allocation3], %s214
          %s216 = sand.u32 %s42, 1
          %s217 = smul.addr %s216, 32
          %s218 = scalar_lea.vmem [#allocation2], %s217
          %s219 = smul.u32 4, %s26
          %s221 = ssub.s32 512, 512
          %222 = vsyncadd %s215, %s221
          %s223 = smul.addr %s25, 4
          %s224 = sadd.s32 %s219, %s223
          %s225 = smul.addr %s224, 128
          %s226 = scalar_lea.hbm %s0, %s225
          %s227 = sshll.u32 %s218, 4
          %s228 = int_to_ptr.vmem [resolvable:$true] %s227
          %233 = dma.hbm_to_vmem [thread:$0]  %s226, 512, %s228, %s215, 128, 128, 8
        $region36: #{tpu_custom_call.1} parent=31 // pred_fallthru
          _
      $region32: #{tpu_custom_call.1} parent=5 // pred_fallthru
        _
      %p234 = scmp.le.s32.totalorder 1, %s18
      %p235 = scmp.lt.s32.totalorder %s18, 3
      %p236 = pnand %p234, %p235
      %p237 = pneg %p236
      // Predicated region
      $region37: #{tpu_custom_call.1} parent=5 // pred_check
        _
      $region38: #{tpu_custom_call.1} parent=5 // pred_check_branch
        %239 = sbr.rel (%p236) target = $region40
      $region39: #{tpu_custom_call.1} parent=5 // pred_region
        %s240 = ssub.s32 %s18, 1
        %s241 = sand.u32 %s45, 1
        %s242 = scalar_lea.sflag [#allocation3], %s241
        %s243 = sand.u32 %s45, 1
        %s244 = smul.addr %s243, 32
        %s245 = scalar_lea.vmem [#allocation2], %s244
        // Predicated region
        $region41: #{tpu_custom_call.1} parent=39 // pred_check
          %p246 = pneg %p58
        $region42: #{tpu_custom_call.1} parent=39 // pred_check_branch
          %248 = sbr.rel (%p246) target = $region44
        $region43: #{tpu_custom_call.1} parent=39 // pred_region
          %249 = dma.done %s242, 512
        $region44: #{tpu_custom_call.1} parent=39 // pred_fallthru
          _
        // Predicated region
        $region45: #{tpu_custom_call.1} parent=39 // pred_check
          %p250 = pneg %p121
        $region46: #{tpu_custom_call.1} parent=39 // pred_check_branch
          %252 = sbr.rel (%p250) target = $region48
        $region47: #{tpu_custom_call.1} parent=39 // pred_region
          %253 = dma.done [#allocation6], 3072
        $region48: #{tpu_custom_call.1} parent=39 // pred_fallthru
          _
        %s254 = sand.u32 %s45, 1
        %s255 = scalar_lea.sflag [#allocation3], %s254
        %s256 = sand.u32 %s45, 1
        %s257 = smul.addr %s256, 32
        %s258 = scalar_lea.vmem [#allocation2], %s257
        %p259 = pneg %p58
        %p260 = pneg %p55
        %p261 = pneg %p79
        %p262 = pneg %p76
        %p263 = pneg %p100
        %p264 = pneg %p97
        %p265 = pneg %p121
        %p266 = pneg %p118
        %p267 = pneg %p142
        %p268 = pneg %p139
        %p269 = pneg %p170
        %p270 = pneg %p167
        %s271 = sand.u32 %s157, 1
        %s272 = scalar_lea.sflag [#allocation4], %s271
        %s273 = sand.u32 %s157, 1
        %s274 = smul.addr %s273, 48
        %s275 = scalar_lea.vmem [#allocation7], %s274
        %s276 = smul.u32 4, %s28
        %s277 = smul.u32 4, %s28
        %v279 = vld [vmem:[%s245] sm:$0xff]
        %v280 = vld [vmem:[%s245 + $0x8] sm:$0xff]
        %v281 = vld [vmem:[%s245 + $0x10] sm:$0xff]
        %v282 = vld [vmem:[%s245 + $0x18] sm:$0xff]
        %283 = vadd.xlane.f32.xlu0 %v279
        %v284 = vpop.xlane.xlu0 %283
        %285 = vadd.xlane.f32.xlu0 %v280
        %v286 = vpop.xlane.xlu0 %285
        %287 = vadd.xlane.f32.xlu0 %v281
        %v288 = vpop.xlane.xlu0 %287
        %289 = vadd.xlane.f32.xlu0 %v282
        %v290 = vpop.xlane.xlu0 %289
        %v291 = vrcp.pop 128.0
        %v292 = vmul.f32 %v284, %v291
        %v293 = vmul.f32 %v286, %v291
        %v294 = vmul.f32 %v288, %v291
        %v295 = vmul.f32 %v290, %v291
        %v296 = vsub.f32 %v279, %v292
        %v297 = vsub.f32 %v280, %v293
        %v298 = vsub.f32 %v281, %v294
        %v299 = vsub.f32 %v282, %v295
        %v300 = vmul.f32 %v296, %v296
        %v301 = vmul.f32 %v297, %v297
        %v302 = vmul.f32 %v298, %v298
        %v303 = vmul.f32 %v299, %v299
        %304 = vadd.xlane.f32.xlu0 %v300
        %v305 = vpop.xlane.xlu0 %304
        %306 = vadd.xlane.f32.xlu0 %v301
        %v307 = vpop.xlane.xlu0 %306
        %308 = vadd.xlane.f32.xlu0 %v302
        %v309 = vpop.xlane.xlu0 %308
        %310 = vadd.xlane.f32.xlu0 %v303
        %v311 = vpop.xlane.xlu0 %310
        %v312 = vmul.f32 %v305, %v291
        %v313 = vmul.f32 %v307, %v291
        %v314 = vmul.f32 %v309, %v291
        %v315 = vmul.f32 %v311, %v291
        %v316 = vadd.f32 %v312, 1e-05
        %v317 = vadd.f32 %v313, 1e-05
        %v318 = vadd.f32 %v314, 1e-05
        %v319 = vadd.f32 %v315, 1e-05
        %v320 = vrsqrt.pop %v316
        %v321 = vrsqrt.pop %v317
        %v322 = vrsqrt.pop %v318
        %v323 = vrsqrt.pop %v319
        %v324 = vmul.f32 %v296, %v320
        %v325 = vmul.f32 %v297, %v321
        %v326 = vmul.f32 %v298, %v322
        %v327 = vmul.f32 %v299, %v323
        %v328 = vld [vmem:[%s1] sm:$0x1]
        %v330 = vlaneseq
        %v331 = vshrl.u32 %v330, 7
        %v332 = vsub.s32 0, %v331
        %v333 = vrot.slane %v328, %v332
        %v335 = vmul.f32 %v324, %v333
        %v336 = vmul.f32 %v325, %v333
        %v337 = vmul.f32 %v326, %v333
        %v338 = vmul.f32 %v327, %v333
        %v339 = vld [vmem:[%s2] sm:$0x1]
        %v341 = vlaneseq
        %v342 = vshrl.u32 %v341, 7
        %v343 = vsub.s32 0, %v342
        %v344 = vrot.slane %v339, %v343
        %v346 = vadd.f32 %v335, %v344
        %v347 = vadd.f32 %v336, %v344
        %v348 = vadd.f32 %v337, %v344
        %v349 = vadd.f32 %v338, %v344
        %v350 = vpack.c.bf16 %v347, %v346
        %v351 = vpack.c.bf16 %v349, %v348
        %v352 = vld [vmem:[#allocation5] sm:$0xff]
        %v353 = vld [vmem:[#allocation5 + $0x8] sm:$0xf]
        %v354 = vld [vmem:[#allocation5 + $0xc] sm:$0xff]
        %v355 = vld [vmem:[#allocation5 + $0x14] sm:$0xf]
        %v356 = vld [vmem:[#allocation5 + $0x18] sm:$0xff]
        %v357 = vld [vmem:[#allocation5 + $0x20] sm:$0xf]
        %v358 = vld [vmem:[#allocation5 + $0x24] sm:$0xff]
        %v359 = vld [vmem:[#allocation5 + $0x2c] sm:$0xf]
        %v360 = vld [vmem:[#allocation5 + $0x30] sm:$0xff]
        %v361 = vld [vmem:[#allocation5 + $0x38] sm:$0xf]
        %v362 = vld [vmem:[#allocation5 + $0x3c] sm:$0xff]
        %v363 = vld [vmem:[#allocation5 + $0x44] sm:$0xf]
        %v364 = vld [vmem:[#allocation5 + $0x48] sm:$0xff]
        %v365 = vld [vmem:[#allocation5 + $0x50] sm:$0xf]
        %v366 = vld [vmem:[#allocation5 + $0x54] sm:$0xff]
        %v367 = vld [vmem:[#allocation5 + $0x5c] sm:$0xf]
        %v368 = vld [vmem:[#allocation5 + $0x60] sm:$0xff]
        %v369 = vld [vmem:[#allocation5 + $0x68] sm:$0xf]
        %v370 = vld [vmem:[#allocation5 + $0x6c] sm:$0xff]
        %v371 = vld [vmem:[#allocation5 + $0x74] sm:$0xf]
        %v372 = vld [vmem:[#allocation5 + $0x78] sm:$0xff]
        %v373 = vld [vmem:[#allocation5 + $0x80] sm:$0xf]
        %v374 = vld [vmem:[#allocation5 + $0x84] sm:$0xff]
        %v375 = vld [vmem:[#allocation5 + $0x8c] sm:$0xf]
        %v376 = vld [vmem:[#allocation5 + $0x90] sm:$0xff]
        %v377 = vld [vmem:[#allocation5 + $0x98] sm:$0xf]
        %v378 = vld [vmem:[#allocation5 + $0x9c] sm:$0xff]
        %v379 = vld [vmem:[#allocation5 + $0xa4] sm:$0xf]
        %v380 = vld [vmem:[#allocation5 + $0xa8] sm:$0xff]
        %v381 = vld [vmem:[#allocation5 + $0xb0] sm:$0xf]
        %v382 = vld [vmem:[#allocation5 + $0xb4] sm:$0xff]
        %v383 = vld [vmem:[#allocation5 + $0xbc] sm:$0xf]
        %v384 = vld [vmem:[%s4] sm:$0x7]
        %v386 = vlaneseq
        %v387 = vshrl.u32 %v386, 7
        %v388 = vsub.s32 0, %v387
        %v389 = vrot.slane %v384, %v388
        %v390 = vlaneseq
        %v391 = vshrl.u32 %v390, 7
        %v392 = vsub.s32 1, %v391
        %v393 = vrot.slane %v384, %v392
        %v394 = vlaneseq
        %v395 = vshrl.u32 %v394, 7
        %v396 = vsub.s32 2, %v395
        %v397 = vrot.slane %v384, %v396
        %v433 = vunpack.c.l.b16 %v352
        %v434 = vunpack.c.h.b16 %v352
        %v435 = vunpack.c.l.b16 %v353
        %v436 = vunpack.c.l.b16 %v354
        %v437 = vunpack.c.h.b16 %v354
        %v438 = vunpack.c.l.b16 %v355
        %v439 = vunpack.c.l.b16 %v356
        %v440 = vunpack.c.h.b16 %v356
        %v441 = vunpack.c.l.b16 %v357
        %v442 = vunpack.c.l.b16 %v358
        %v443 = vunpack.c.h.b16 %v358
        %v444 = vunpack.c.l.b16 %v359
        %v445 = vunpack.c.l.b16 %v360
        %v446 = vunpack.c.h.b16 %v360
        %v447 = vunpack.c.l.b16 %v361
        %v448 = vunpack.c.l.b16 %v362
        %v449 = vunpack.c.h.b16 %v362
        %v450 = vunpack.c.l.b16 %v363
        %v451 = vunpack.c.l.b16 %v364
        %v452 = vunpack.c.h.b16 %v364
        %v453 = vunpack.c.l.b16 %v365
        %v454 = vunpack.c.l.b16 %v366
        %v455 = vunpack.c.h.b16 %v366
        %v456 = vunpack.c.l.b16 %v367
        %v457 = vunpack.c.l.b16 %v368
        %v458 = vunpack.c.h.b16 %v368
        %v459 = vunpack.c.l.b16 %v369
        %v460 = vunpack.c.l.b16 %v370
        %v461 = vunpack.c.h.b16 %v370
        %v462 = vunpack.c.l.b16 %v371
        %v463 = vunpack.c.l.b16 %v372
        %v464 = vunpack.c.h.b16 %v372
        %v465 = vunpack.c.l.b16 %v373
        %v466 = vunpack.c.l.b16 %v374
        %v467 = vunpack.c.h.b16 %v374
        %v468 = vunpack.c.l.b16 %v375
        %v469 = vunpack.c.l.b16 %v376
        %v470 = vunpack.c.h.b16 %v376
        %v471 = vunpack.c.l.b16 %v377
        %v472 = vunpack.c.l.b16 %v378
        %v473 = vunpack.c.h.b16 %v378
        %v474 = vunpack.c.l.b16 %v379
        %v475 = vunpack.c.l.b16 %v380
        %v476 = vunpack.c.h.b16 %v380
        %v477 = vunpack.c.l.b16 %v381
        %v478 = vunpack.c.l.b16 %v382
        %v479 = vunpack.c.h.b16 %v382
        %v480 = vunpack.c.l.b16 %v383
        %v481 = vpack.c.b16 %v436, %v433
        %v482 = vpack.c.b16 %v437, %v434
        %v483 = vpack.c.b16 %v438, %v435
        %v484 = vpack.c.b16 %v442, %v439
        %v485 = vpack.c.b16 %v443, %v440
        %v486 = vpack.c.b16 %v444, %v441
        %v487 = vpack.c.b16 %v448, %v445
        %v488 = vpack.c.b16 %v449, %v446
        %v489 = vpack.c.b16 %v450, %v447
        %v490 = vpack.c.b16 %v454, %v451
        %v491 = vpack.c.b16 %v455, %v452
        %v492 = vpack.c.b16 %v456, %v453
        %v493 = vpack.c.b16 %v460, %v457
        %v494 = vpack.c.b16 %v461, %v458
        %v495 = vpack.c.b16 %v462, %v459
        %v496 = vpack.c.b16 %v466, %v463
        %v497 = vpack.c.b16 %v467, %v464
        %v498 = vpack.c.b16 %v468, %v465
        %v499 = vpack.c.b16 %v472, %v469
        %v500 = vpack.c.b16 %v473, %v470
        %v501 = vpack.c.b16 %v474, %v471
        %v502 = vpack.c.b16 %v478, %v475
        %v503 = vpack.c.b16 %v479, %v476
        %v504 = vpack.c.b16 %v480, %v477
        %529 = vmatprep.subr.bf16.mxu0 %v503
        %530 = vmatpush1.bf16.msra.mxu0 %v502
        %531 = vmatprep.subr.bf16.mxu0 %v500
        %532 = vmatpush1.bf16.msra.mxu0 %v499
        %533 = vmatprep.subr.bf16.mxu0 %v497
        %534 = vmatpush1.bf16.msra.mxu0 %v496
        %535 = vmatprep.subr.bf16.mxu0 %v494
        %536 = vmatpush1.bf16.msra.mxu0 %v493
        %537 = vmatprep.subr.bf16.mxu0 %v491
        %538 = vmatpush1.bf16.msra.mxu0 %v490
        %539 = vmatprep.subr.bf16.mxu0 %v488
        %540 = vmatpush1.bf16.msra.mxu0 %v487
        %541 = vmatprep.subr.bf16.mxu0 %v485
        %542 = vmatpush1.bf16.msra.mxu0 %v484
        %543 = vmatprep.subr.bf16.mxu0 %v482
        %544 = vmatpush1.bf16.msra.mxu0 %v481
        %545 = vmatprep.subr.bf16.mxu0 0
        %546 = vmatpush2.bf16.msra.mxu0 0
        %547 = vmatprep.subr.bf16.mxu0 0
        %548 = vmatpush2.bf16.msra.mxu0 0
        %549 = vmatprep.subr.bf16.mxu0 0
        %550 = vmatpush2.bf16.msra.mxu0 0
        %551 = vmatprep.subr.bf16.mxu0 0
        %552 = vmatpush2.bf16.msra.mxu0 0
        %553 = vmatprep.subr.bf16.mxu0 0
        %554 = vmatpush2.bf16.msra.mxu0 0
        %555 = vmatprep.subr.bf16.mxu0 0
        %556 = vmatpush2.bf16.msra.mxu0 0
        %557 = vmatprep.subr.bf16.mxu0 0
        %558 = vmatpush2.bf16.msra.mxu0 0
        %559 = vmatprep.subr.bf16.mxu0 0
        %560 = vmatpush2.bf16.msra.mxu0 0
        %561 = vmatprep.mubr.bf16.mxu0 0
        %562 = vmatmul.mubr.bf16.gmra.mxu0 %v350
        %v563 = vpop.f32.mrf.mxu0
        %v564 = vadd.f32 %v389, %v563
        %v565 = vpop.f32.mrf.mxu0
        %v566 = vadd.f32 %v393, %v565
        %v567 = vpop.f32.mrf.mxu0
        %v568 = vadd.f32 %v389, %v567
        %v569 = vpop.f32.mrf.mxu0
        %v570 = vadd.f32 %v393, %v569
        %571 = vmatprep.mubr.bf16.mxu0 0
        %572 = vmatmul.mubr.bf16.gmra.mxu0 %v351
        %v573 = vpop.f32.mrf.mxu0
        %v574 = vadd.f32 %v389, %v573
        %v575 = vpop.f32.mrf.mxu0
        %v576 = vadd.f32 %v393, %v575
        %v577 = vpop.f32.mrf.mxu0
        %v578 = vadd.f32 %v389, %v577
        %v579 = vpop.f32.mrf.mxu0
        %v580 = vadd.f32 %v393, %v579
        %581 = vdwg.mxu0
        %582 = vmatprep.subr.bf16.mxu0 0
        %583 = vmatpush1.bf16.msra.mxu0 %v504
        %584 = vmatprep.subr.bf16.mxu0 0
        %585 = vmatpush1.bf16.msra.mxu0 %v501
        %586 = vmatprep.subr.bf16.mxu0 0
        %587 = vmatpush1.bf16.msra.mxu0 %v498
        %588 = vmatprep.subr.bf16.mxu0 0
        %589 = vmatpush1.bf16.msra.mxu0 %v495
        %590 = vmatprep.subr.bf16.mxu0 0
        %591 = vmatpush1.bf16.msra.mxu0 %v492
        %592 = vmatprep.subr.bf16.mxu0 0
        %593 = vmatpush1.bf16.msra.mxu0 %v489
        %594 = vmatprep.subr.bf16.mxu0 0
        %595 = vmatpush1.bf16.msra.mxu0 %v486
        %596 = vmatprep.subr.bf16.mxu0 0
        %597 = vmatpush1.bf16.msra.mxu0 %v483
        %598 = vmatprep.subr.bf16.mxu0 0
        %599 = vmatpush2.bf16.msra.mxu0 0
        %600 = vmatprep.subr.bf16.mxu0 0
        %601 = vmatpush2.bf16.msra.mxu0 0
        %602 = vmatprep.subr.bf16.mxu0 0
        %603 = vmatpush2.bf16.msra.mxu0 0
        %604 = vmatprep.subr.bf16.mxu0 0
        %605 = vmatpush2.bf16.msra.mxu0 0
        %606 = vmatprep.subr.bf16.mxu0 0
        %607 = vmatpush2.bf16.msra.mxu0 0
        %608 = vmatprep.subr.bf16.mxu0 0
        %609 = vmatpush2.bf16.msra.mxu0 0
        %610 = vmatprep.subr.bf16.mxu0 0
        %611 = vmatpush2.bf16.msra.mxu0 0
        %612 = vmatprep.subr.bf16.mxu0 0
        %613 = vmatpush2.bf16.msra.mxu0 0
        %614 = vmatprep.mubr.bf16.mxu0 0
        %615 = vmatmul.mubr.bf16.gmra.mxu0 %v350
        %v616 = vpop.f32.mrf.mxu0
        %v617 = vadd.f32 %v397, %v616
        %v618 = vpop.f32.mrf.mxu0
        %v619 = vpop.f32.mrf.mxu0
        %v620 = vadd.f32 %v397, %v619
        %v621 = vpop.f32.mrf.mxu0
        %622 = vmatprep.mubr.bf16.mxu0 0
        %623 = vmatmul.mubr.bf16.gmra.mxu0 %v351
        %v624 = vpop.f32.mrf.mxu0
        %v625 = vadd.f32 %v397, %v624
        %v626 = vpop.f32.mrf.mxu0
        %v627 = vpop.f32.mrf.mxu0
        %v628 = vadd.f32 %v397, %v627
        %v629 = vpop.f32.mrf.mxu0
        %630 = vdwg.mxu0
        %v631 = vpack.c.bf16 %v568, %v564
        %v632 = vpack.c.bf16 %v570, %v566
        %v633 = vpack.c.bf16 %v620, %v617
        %v634 = vpack.c.bf16 %v578, %v574
        %v635 = vpack.c.bf16 %v580, %v576
        %v636 = vpack.c.bf16 %v628, %v625
        %v643 = vunpack.c.l.b16 %v631
        %v644 = vunpack.c.l.b16 %v632
        %v645 = vunpack.c.l.b16 %v633
        %v646 = vunpack.c.h.b16 %v631
        %v647 = vunpack.c.h.b16 %v632
        %v648 = vunpack.c.h.b16 %v633
        %v649 = vunpack.c.l.b16 %v634
        %v650 = vunpack.c.l.b16 %v635
        %v651 = vunpack.c.l.b16 %v636
        %v652 = vunpack.c.h.b16 %v634
        %v653 = vunpack.c.h.b16 %v635
        %v654 = vunpack.c.h.b16 %v636
        %v655 = vpack.c.b16 %v644, %v643
        %v656 = vpack.c.b16 %v645, %v645
        %v657 = vpack.c.b16 %v647, %v646
        %v658 = vpack.c.b16 %v648, %v648
        %v659 = vpack.c.b16 %v650, %v649
        %v660 = vpack.c.b16 %v651, %v651
        %v661 = vpack.c.b16 %v653, %v652
        %v662 = vpack.c.b16 %v654, %v654
        %671 = vst [vmem:[%s275] sm:$0xff] %v655
        %672 = vst [vmem:[%s275 + $0x8] sm:$0xf] %v656
        %673 = vst [vmem:[%s275 + $0xc] sm:$0xff] %v657
        %674 = vst [vmem:[%s275 + $0x14] sm:$0xf] %v658
        %675 = vst [vmem:[%s275 + $0x18] sm:$0xff] %v659
        %676 = vst [vmem:[%s275 + $0x20] sm:$0xf] %v660
        %677 = vst [vmem:[%s275 + $0x24] sm:$0xff] %v661
        %678 = vst [vmem:[%s275 + $0x2c] sm:$0xf] %v662
        %s679 = sand.u32 %s157, 1
        %s680 = scalar_lea.sflag [#allocation4], %s679
        %s681 = sand.u32 %s157, 1
        %s682 = smul.addr %s681, 48
        %s683 = scalar_lea.vmem [#allocation7], %s682
        // Predicated region
        $region49: #{tpu_custom_call.1} parent=39 // pred_check
          %p684 = pneg %p167
        $region50: #{tpu_custom_call.1} parent=39 // pred_check_branch
          %686 = sbr.rel (%p684) target = $region52
        $region51: #{tpu_custom_call.1} parent=39 // pred_region
          %s687 = smul.u32 4, %s28
          %s689 = ssub.s32 768, 768
          %690 = vsyncadd %s680, %s689
          %s691 = smul.addr %s687, 3
          %s692 = smul.addr %s27, 12
          %s693 = sadd.s32 %s691, %s692
          %s694 = smul.addr %s693, 64
          %s695 = scalar_lea.hbm %s5, %s694
          %s696 = sshll.u32 %s683, 4
          %s697 = int_to_ptr.vmem [resolvable:$true] %s696
          %702 = dma.vmem_to_hbm [thread:$0]  %s697, 768, %s695, %s680, 192, 192, 12
        $region52: #{tpu_custom_call.1} parent=39 // pred_fallthru
          _
      $region40: #{tpu_custom_call.1} parent=5 // pred_fallthru
        _
      %p703 = scmp.le.s32.totalorder 2, %s18
      // Predicated region
      $region53: #{tpu_custom_call.1} parent=5 // pred_check
        %p704 = pneg %p703
      $region54: #{tpu_custom_call.1} parent=5 // pred_check_branch
        %706 = sbr.rel (%p704) target = $region56
      $region55: #{tpu_custom_call.1} parent=5 // pred_region
        %s707 = ssub.s32 %s18, 2
        // Predicated region
        $region57: #{tpu_custom_call.1} parent=55 // pred_check
          %p708 = pneg %p173
        $region58: #{tpu_custom_call.1} parent=55 // pred_check_branch
          %710 = sbr.rel (%p708) target = $region60
        $region59: #{tpu_custom_call.1} parent=55 // pred_region
          %s711 = sand.u32 %s158, 1
          %s712 = scalar_lea.sflag [#allocation4], %s711
          %s713 = sand.u32 %s158, 1
          %s714 = smul.addr %s713, 48
          %s715 = scalar_lea.vmem [#allocation7], %s714
          %716 = dma.done %s712, 768
        $region60: #{tpu_custom_call.1} parent=55 // pred_fallthru
          _
      $region56: #{tpu_custom_call.1} parent=5 // pred_fallthru
        _
    $region6: #{tpu_custom_call.1} parent=1 // loop_footer
      %s22 = sadd.s32 1, %s18
    $region7: #{tpu_custom_call.1} parent=1 // loop_footer_branch
      %17 = sbr.rel target = $region3
    $region8: #{tpu_custom_call.1} parent=1 // loop_exit
      _
    %717 = vsyncpa [#allocation3], 1
    %s718 = scalar_lea.sflag [#allocation3], 1
    %719 = vsyncpa %s718, 1
    %720 = vsyncpa [#allocation6], 1
    %721 = vsyncpa [#allocation4], 1
    %s722 = scalar_lea.sflag [#allocation4], 1
    %723 = vsyncpa %s722, 1

// kernel: tpu_custom_call.1
$region0: #{tpu_custom_call.1}
  #allocation0 [shape = 'u32[]', space=smem, size = 0x4, offset = 0x4, fixed_abs, tag = 'smem constant byte address 0x4 - core index']
  #allocation1 [shape = 'u32[144,128]{1,0:T(1,128)}', space=vmem, size = 0x12000, scoped, tag = 'internal scratch']
  %s0 = inlined_call_operand.hbm [shape: f32[2,32,128], index: 0, kind: input, shape index: {}]
  %s1 = inlined_call_operand.vmem [shape: f32[1,128], index: 1, kind: input, shape index: {}]
  %s2 = inlined_call_operand.vmem [shape: f32[1,128], index: 2, kind: input, shape index: {}]
  %s3 = inlined_call_operand.hbm [shape: bf16[128,384], index: 3, kind: input, shape index: {}]
  %s4 = inlined_call_operand.vmem [shape: f32[1,384], index: 4, kind: input, shape index: {}]
  %s5 = inlined_call_operand.hbm [shape: bf16[2,32,384], index: 5, kind: output, shape index: {}]
  %s6 = sld [smem:[#allocation0]]
  $region61: #{tpu_custom_call.1} parent=0
    _
  %s8 = ssub.s32 1, %s6
  %s9 = scalar_select 0, %s8, %s6
  $region1: #{tpu_custom_call.1} parent=0
    #allocation2 [shape = 'u8[32768]{0}', space=vmem, size = 0x8000, scoped, tag = 'input window, operand 0']
    #allocation3 [shape = 's32[2]{0}', space=sflag, size = 0x8, scoped, tag = 'scoped memory for tpu_custom_call.1']
    #allocation4 [shape = 's32[2]{0}', space=sflag, size = 0x8, scoped, tag = 'scoped memory for tpu_custom_call.1']
    #allocation5 [shape = 'u8[98304]{0}', space=vmem, size = 0x18000, scoped, tag = 'input window, operand 3, single buffered']
    #allocation6 [shape = 's32[1]{0}', space=sflag, size = 0x4, scoped, tag = 'scoped memory for tpu_custom_call.1']
    #allocation7 [shape = 'u8[49152]{0}', space=vmem, size = 0xc000, scoped, tag = 'output window, operand 0']
    %10 = vsyncpa [#allocation3], 0
    %s11 = scalar_lea.sflag [#allocation3], 1
    %12 = vsyncpa %s11, 0
    %13 = vsyncpa [#allocation6], 0
    %14 = vsyncpa [#allocation4], 0
    %s15 = scalar_lea.sflag [#allocation4], 1
    %16 = vsyncpa %s15, 0
    loop: start=0, step=1, limit=4
    $region2: #{tpu_custom_call.1} parent=1 // loop_pre_header
      _
    $region3: #{tpu_custom_call.1} parent=1 // loop_header
      %s18 = sphi 0, %s22
      %p19 = scmp.ge.s32.totalorder %s18, 4
      %s25 = sphi 0, %s37
      %s26 = sphi 0, %s33
      %s27 = sphi 0, %s25
      %s28 = sphi 0, %s26
      %s29 = sphi 0, %s27
      %s30 = sphi 0, %s28
      %s42 = sphi 0, %s44
      %s45 = sphi 0, %s42
      %s46 = sphi 0, %s45
      %s62 = sphi 0, %s46
      %s66 = sphi 0, %s66
      %s68 = sphi 0, %s66
      %s69 = sphi 0, %s68
      %s83 = sphi 0, %s69
      %s87 = sphi 0, %s87
      %s89 = sphi 0, %s87
      %s90 = sphi 0, %s89
      %s104 = sphi 0, %s90
      %s108 = sphi 0, %s108
      %s110 = sphi 0, %s108
      %s111 = sphi 0, %s110
      %s125 = sphi 0, %s111
      %s129 = sphi 0, %s129
      %s131 = sphi 0, %s129
      %s132 = sphi 0, %s131
      %s146 = sphi 0, %s132
      %s154 = sphi 0, %s156
      %s157 = sphi 0, %s154
      %s158 = sphi 0, %s157
      %s174 = sphi 0, %s158
    $region4: #{tpu_custom_call.1} parent=1 // loop_header_branch
      %21 = sbr.rel (%p19) target = $region8
    $region5: #{tpu_custom_call.1} parent=1 // loop_body
      %s23 = ssub.s32 %s18, 1
      %s24 = ssub.s32 %s18, 2
      %s31 = sadd.s32 1, %s26
      %p32 = scmp.ge.s32.totalorder %s31, 1
      %s33 = scalar_select %p32, 0, %s31
      %s34 = sadd.s32 1, %s25
      %s35 = scalar_select %p32, %s34, %s25
      %p36 = scmp.ge.s32.totalorder %s35, 2
      %s37 = scalar_select %p36, 0, %s35
      %s38 = ssub.s32 %s25, %s37
      %s39 = ssub.s32 %s26, %s33
      %s40 = sor.u32 %s38, %s39
      %p41 = scmp.eq.s32.totalorder %s40, 0
      %s43 = sadd.s32 %s42, 1
      %s44 = scalar_select %p41, %s42, %s43
      %p47 = pneg %p41
      %p48 = scmp.eq.s32.totalorder %s18, 1
      %p49 = por %p47, %p48
      %p50 = scmp.ne.s32.totalorder %s42, %s45
      %p51 = scmp.eq.s32.totalorder %s18, 0
      %p52 = por %p50, %p51
      %p53 = scmp.ne.s32.totalorder %s42, %s45
      %p54 = scmp.eq.s32.totalorder %s23, 1
      %p55 = por %p53, %p54
      %p56 = scmp.ne.s32.totalorder %s45, %s46
      %p57 = scmp.eq.s32.totalorder %s23, 0
      %p58 = por %p56, %p57
      %p59 = scmp.ne.s32.totalorder %s45, %s46
      %p60 = scmp.eq.s32.totalorder %s24, 1
      %p61 = por %p59, %p60
      %p63 = scmp.ne.s32.totalorder %s46, %s62
      %p64 = scmp.eq.s32.totalorder %s24, 0
      %p65 = por %p63, %p64
      %s67 = sadd.s32 %s66, 1
      %p70 = scmp.eq.s32.totalorder %s18, 1
      %p71 = scmp.ne.s32.totalorder %s66, %s68
      %p72 = scmp.eq.s32.totalorder %s18, 0
      %p73 = por %p71, %p72
      %p74 = scmp.ne.s32.totalorder %s66, %s68
      %p75 = scmp.eq.s32.totalorder %s23, 1
      %p76 = por %p74, %p75
      %p77 = scmp.ne.s32.totalorder %s68, %s69
      %p78 = scmp.eq.s32.totalorder %s23, 0
      %p79 = por %p77, %p78
      %p80 = scmp.ne.s32.totalorder %s68, %s69
      %p81 = scmp.eq.s32.totalorder %s24, 1
      %p82 = por %p80, %p81
      %p84 = scmp.ne.s32.totalorder %s69, %s83
      %p85 = scmp.eq.s32.totalorder %s24, 0
      %p86 = por %p84, %p85
      %s88 = sadd.s32 %s87, 1
      %p91 = scmp.eq.s32.totalorder %s18, 1
      %p92 = scmp.ne.s32.totalorder %s87, %s89
      %p93 = scmp.eq.s32.totalorder %s18, 0
      %p94 = por %p92, %p93
      %p95 = scmp.ne.s32.totalorder %s87, %s89
      %p96 = scmp.eq.s32.totalorder %s23, 1
      %p97 = por %p95, %p96
      %p98 = scmp.ne.s32.totalorder %s89, %s90
      %p99 = scmp.eq.s32.totalorder %s23, 0
      %p100 = por %p98, %p99
      %p101 = scmp.ne.s32.totalorder %s89, %s90
      %p102 = scmp.eq.s32.totalorder %s24, 1
      %p103 = por %p101, %p102
      %p105 = scmp.ne.s32.totalorder %s90, %s104
      %p106 = scmp.eq.s32.totalorder %s24, 0
      %p107 = por %p105, %p106
      %s109 = sadd.s32 %s108, 1
      %p112 = scmp.eq.s32.totalorder %s18, 1
      %p113 = scmp.ne.s32.totalorder %s108, %s110
      %p114 = scmp.eq.s32.totalorder %s18, 0
      %p115 = por %p113, %p114
      %p116 = scmp.ne.s32.totalorder %s108, %s110
      %p117 = scmp.eq.s32.totalorder %s23, 1
      %p118 = por %p116, %p117
      %p119 = scmp.ne.s32.totalorder %s110, %s111
      %p120 = scmp.eq.s32.totalorder %s23, 0
      %p121 = por %p119, %p120
      %p122 = scmp.ne.s32.totalorder %s110, %s111
      %p123 = scmp.eq.s32.totalorder %s24, 1
      %p124 = por %p122, %p123
      %p126 = scmp.ne.s32.totalorder %s111, %s125
      %p127 = scmp.eq.s32.totalorder %s24, 0
      %p128 = por %p126, %p127
      %s130 = sadd.s32 %s129, 1
      %p133 = scmp.eq.s32.totalorder %s18, 1
      %p134 = scmp.ne.s32.totalorder %s129, %s131
      %p135 = scmp.eq.s32.totalorder %s18, 0
      %p136 = por %p134, %p135
      %p137 = scmp.ne.s32.totalorder %s129, %s131
      %p138 = scmp.eq.s32.totalorder %s23, 1
      %p139 = por %p137, %p138
      %p140 = scmp.ne.s32.totalorder %s131, %s132
      %p141 = scmp.eq.s32.totalorder %s23, 0
      %p142 = por %p140, %p141
      %p143 = scmp.ne.s32.totalorder %s131, %s132
      %p144 = scmp.eq.s32.totalorder %s24, 1
      %p145 = por %p143, %p144
      %p147 = scmp.ne.s32.totalorder %s132, %s146
      %p148 = scmp.eq.s32.totalorder %s24, 0
      %p149 = por %p147, %p148
      %s150 = ssub.s32 %s25, %s37
      %s151 = ssub.s32 %s26, %s33
      %s152 = sor.u32 %s150, %s151
      %p153 = scmp.eq.s32.totalorder %s152, 0
      %s155 = sadd.s32 %s154, 1
      %s156 = scalar_select %p153, %s154, %s155
      %p159 = pneg %p153
      %p160 = scmp.eq.s32.totalorder %s18, 1
      %p161 = por %p159, %p160
      %p162 = scmp.ne.s32.totalorder %s154, %s157
      %p163 = scmp.eq.s32.totalorder %s18, 0
      %p164 = por %p162, %p163
      %p165 = scmp.ne.s32.totalorder %s154, %s157
      %p166 = scmp.eq.s32.totalorder %s23, 1
      %p167 = por %p165, %p166
      %p168 = scmp.ne.s32.totalorder %s157, %s158
      %p169 = scmp.eq.s32.totalorder %s23, 0
      %p170 = por %p168, %p169
      %p171 = scmp.ne.s32.totalorder %s157, %s158
      %p172 = scmp.eq.s32.totalorder %s24, 1
      %p173 = por %p171, %p172
      %p175 = scmp.ne.s32.totalorder %s158, %s174
      %p176 = scmp.eq.s32.totalorder %s24, 0
      %p177 = por %p175, %p176
      %p178 = scmp.le.s32.totalorder 1, %s18
      %p179 = scmp.lt.s32.totalorder %s18, 3
      %p180 = pnand %p178, %p179
      %p181 = pneg %p180
      // Predicated region
      $region9: #{tpu_custom_call.1} parent=5 // pred_check
        _
      $region10: #{tpu_custom_call.1} parent=5 // pred_check_branch
        %183 = sbr.rel (%p180) target = $region12
      $region11: #{tpu_custom_call.1} parent=5 // pred_region
        %s184 = ssub.s32 %s18, 1
        // Predicated region
        $region13: #{tpu_custom_call.1} parent=11 // pred_check
          %p185 = pneg %p79
        $region14: #{tpu_custom_call.1} parent=11 // pred_check_branch
          %187 = sbr.rel (%p185) target = $region16
        $region15: #{tpu_custom_call.1} parent=11 // pred_region
          _
        $region16: #{tpu_custom_call.1} parent=11 // pred_fallthru
          _
        // Predicated region
        $region17: #{tpu_custom_call.1} parent=11 // pred_check
          %p188 = pneg %p100
        $region18: #{tpu_custom_call.1} parent=11 // pred_check_branch
          %190 = sbr.rel (%p188) target = $region20
        $region19: #{tpu_custom_call.1} parent=11 // pred_region
          _
        $region20: #{tpu_custom_call.1} parent=11 // pred_fallthru
          _
        // Predicated region
        $region21: #{tpu_custom_call.1} parent=11 // pred_check
          %p191 = pneg %p121
        $region22: #{tpu_custom_call.1} parent=11 // pred_check_branch
          %193 = sbr.rel (%p191) target = $region24
        $region23: #{tpu_custom_call.1} parent=11 // pred_region
          %s195 = ssub.s32 3072, 3072
          %196 = vsyncadd [#allocation6], %s195
          %s197 = sshll.u32 [#allocation5], 4
          %s198 = int_to_ptr.vmem [resolvable:$true] %s197
          %203 = dma.hbm_to_vmem [thread:$0]  %s3, 3072, %s198, [#allocation6], 192, 192, 12
        $region24: #{tpu_custom_call.1} parent=11 // pred_fallthru
          _
        // Predicated region
        $region25: #{tpu_custom_call.1} parent=11 // pred_check
          %p204 = pneg %p142
        $region26: #{tpu_custom_call.1} parent=11 // pred_check_branch
          %206 = sbr.rel (%p204) target = $region28
        $region27: #{tpu_custom_call.1} parent=11 // pred_region
          _
        $region28: #{tpu_custom_call.1} parent=11 // pred_fallthru
          _
      $region12: #{tpu_custom_call.1} parent=5 // pred_fallthru
        _
      %p207 = scmp.lt.s32.totalorder %s18, 2
      // Predicated region
      $region29: #{tpu_custom_call.1} parent=5 // pred_check
        %p208 = pneg %p207
      $region30: #{tpu_custom_call.1} parent=5 // pred_check_branch
        %210 = sbr.rel (%p208) target = $region32
      $region31: #{tpu_custom_call.1} parent=5 // pred_region
        // Predicated region
        $region33: #{tpu_custom_call.1} parent=31 // pred_check
          %p211 = pneg %p52
        $region34: #{tpu_custom_call.1} parent=31 // pred_check_branch
          %213 = sbr.rel (%p211) target = $region36
        $region35: #{tpu_custom_call.1} parent=31 // pred_region
          %s214 = sand.u32 %s42, 1
          %s215 = scalar_lea.sflag [#allocation3], %s214
          %s216 = sand.u32 %s42, 1
          %s217 = smul.addr %s216, 32
          %s218 = scalar_lea.vmem [#allocation2], %s217
          %s219 = smul.u32 4, %s26
          %s221 = ssub.s32 512, 512
          %222 = vsyncadd %s215, %s221
          %s223 = smul.addr %s25, 4
          %s224 = sadd.s32 %s219, %s223
          %s225 = smul.addr %s224, 128
          %s226 = scalar_lea.hbm %s0, %s225
          %s227 = sshll.u32 %s218, 4
          %s228 = int_to_ptr.vmem [resolvable:$true] %s227
          %233 = dma.hbm_to_vmem [thread:$0]  %s226, 512, %s228, %s215, 128, 128, 8
        $region36: #{tpu_custom_call.1} parent=31 // pred_fallthru
          _
      $region32: #{tpu_custom_call.1} parent=5 // pred_fallthru
        _
      %p234 = scmp.le.s32.totalorder 1, %s18
      %p235 = scmp.lt.s32.totalorder %s18, 3
      %p236 = pnand %p234, %p235
      %p237 = pneg %p236
      // Predicated region
      $region37: #{tpu_custom_call.1} parent=5 // pred_check
        _
      $region38: #{tpu_custom_call.1} parent=5 // pred_check_branch
        %239 = sbr.rel (%p236) target = $region40
      $region39: #{tpu_custom_call.1} parent=5 // pred_region
        %s240 = ssub.s32 %s18, 1
        %s241 = sand.u32 %s45, 1
        %s242 = scalar_lea.sflag [#allocation3], %s241
        %s243 = sand.u32 %s45, 1
        %s244 = smul.addr %s243, 32
        %s245 = scalar_lea.vmem [#allocation2], %s244
        // Predicated region
        $region41: #{tpu_custom_call.1} parent=39 // pred_check
          %p246 = pneg %p58
        $region42: #{tpu_custom_call.1} parent=39 // pred_check_branch
          %248 = sbr.rel (%p246) target = $region44
        $region43: #{tpu_custom_call.1} parent=39 // pred_region
          %249 = dma.done %s242, 512
        $region44: #{tpu_custom_call.1} parent=39 // pred_fallthru
          _
        // Predicated region
        $region45: #{tpu_custom_call.1} parent=39 // pred_check
          %p250 = pneg %p121
        $region46: #{tpu_custom_call.1} parent=39 // pred_check_branch
          %252 = sbr.rel (%p250) target = $region48
        $region47: #{tpu_custom_call.1} parent=39 // pred_region
          %253 = dma.done [#allocation6], 3072
        $region48: #{tpu_custom_call.1} parent=39 // pred_fallthru
          _
        %s254 = sand.u32 %s45, 1
        %s255 = scalar_lea.sflag [#allocation3], %s254
        %s256 = sand.u32 %s45, 1
        %s257 = smul.addr %s256, 32
        %s258 = scalar_lea.vmem [#allocation2], %s257
        %p259 = pneg %p58
        %p260 = pneg %p55
        %p261 = pneg %p79
        %p262 = pneg %p76
        %p263 = pneg %p100
        %p264 = pneg %p97
        %p265 = pneg %p121
        %p266 = pneg %p118
        %p267 = pneg %p142
        %p268 = pneg %p139
        %p269 = pneg %p170
        %p270 = pneg %p167
        %s271 = sand.u32 %s157, 1
        %s272 = scalar_lea.sflag [#allocation4], %s271
        %s273 = sand.u32 %s157, 1
        %s274 = smul.addr %s273, 48
        %s275 = scalar_lea.vmem [#allocation7], %s274
        %s276 = smul.u32 4, %s28
        %s277 = smul.u32 4, %s28
        %v279 = vld [vmem:[%s245] sm:$0xff]
        %v280 = vld [vmem:[%s245 + $0x8] sm:$0xff]
        %v281 = vld [vmem:[%s245 + $0x10] sm:$0xff]
        %v282 = vld [vmem:[%s245 + $0x18] sm:$0xff]
        %283 = vadd.xlane.f32.xlu0 %v279
        %v284 = vpop.xlane.xlu0 %283
        %285 = vadd.xlane.f32.xlu0 %v280
        %v286 = vpop.xlane.xlu0 %285
        %287 = vadd.xlane.f32.xlu0 %v281
        %v288 = vpop.xlane.xlu0 %287
        %289 = vadd.xlane.f32.xlu0 %v282
        %v290 = vpop.xlane.xlu0 %289
        %v291 = vrcp.pop 128.0
        %v292 = vmul.f32 %v284, %v291
        %v293 = vmul.f32 %v286, %v291
        %v294 = vmul.f32 %v288, %v291
        %v295 = vmul.f32 %v290, %v291
        %v296 = vsub.f32 %v279, %v292
        %v297 = vsub.f32 %v280, %v293
        %v298 = vsub.f32 %v281, %v294
        %v299 = vsub.f32 %v282, %v295
        %v300 = vmul.f32 %v296, %v296
        %v301 = vmul.f32 %v297, %v297
        %v302 = vmul.f32 %v298, %v298
        %v303 = vmul.f32 %v299, %v299
        %304 = vadd.xlane.f32.xlu0 %v300
        %v305 = vpop.xlane.xlu0 %304
        %306 = vadd.xlane.f32.xlu0 %v301
        %v307 = vpop.xlane.xlu0 %306
        %308 = vadd.xlane.f32.xlu0 %v302
        %v309 = vpop.xlane.xlu0 %308
        %310 = vadd.xlane.f32.xlu0 %v303
        %v311 = vpop.xlane.xlu0 %310
        %v312 = vmul.f32 %v305, %v291
        %v313 = vmul.f32 %v307, %v291
        %v314 = vmul.f32 %v309, %v291
        %v315 = vmul.f32 %v311, %v291
        %v316 = vadd.f32 %v312, 1e-05
        %v317 = vadd.f32 %v313, 1e-05
        %v318 = vadd.f32 %v314, 1e-05
        %v319 = vadd.f32 %v315, 1e-05
        %v320 = vrsqrt.pop %v316
        %v321 = vrsqrt.pop %v317
        %v322 = vrsqrt.pop %v318
        %v323 = vrsqrt.pop %v319
        %v324 = vmul.f32 %v296, %v320
        %v325 = vmul.f32 %v297, %v321
        %v326 = vmul.f32 %v298, %v322
        %v327 = vmul.f32 %v299, %v323
        %v328 = vld [vmem:[%s1] sm:$0x1]
        %v330 = vlaneseq
        %v331 = vshrl.u32 %v330, 7
        %v332 = vsub.s32 0, %v331
        %v333 = vrot.slane %v328, %v332
        %v335 = vmul.f32 %v324, %v333
        %v336 = vmul.f32 %v325, %v333
        %v337 = vmul.f32 %v326, %v333
        %v338 = vmul.f32 %v327, %v333
        %v339 = vld [vmem:[%s2] sm:$0x1]
        %v341 = vlaneseq
        %v342 = vshrl.u32 %v341, 7
        %v343 = vsub.s32 0, %v342
        %v344 = vrot.slane %v339, %v343
        %v346 = vadd.f32 %v335, %v344
        %v347 = vadd.f32 %v336, %v344
        %v348 = vadd.f32 %v337, %v344
        %v349 = vadd.f32 %v338, %v344
        %v350 = vpack.c.bf16 %v347, %v346
        %v351 = vpack.c.bf16 %v349, %v348
        %v352 = vld [vmem:[#allocation5] sm:$0xff]
        %v353 = vld [vmem:[#allocation5 + $0x8] sm:$0xf]
        %v354 = vld [vmem:[#allocation5 + $0xc] sm:$0xff]
        %v355 = vld [vmem:[#allocation5 + $0x14] sm:$0xf]
        %v356 = vld [vmem:[#allocation5 + $0x18] sm:$0xff]
        %v357 = vld [vmem:[#allocation5 + $0x20] sm:$0xf]
        %v358 = vld [vmem:[#allocation5 + $0x24] sm:$0xff]
        %v359 = vld [vmem:[#allocation5 + $0x2c] sm:$0xf]
        %v360 = vld [vmem:[#allocation5 + $0x30] sm:$0xff]
        %v361 = vld [vmem:[#allocation5 + $0x38] sm:$0xf]
        %v362 = vld [vmem:[#allocation5 + $0x3c] sm:$0xff]
        %v363 = vld [vmem:[#allocation5 + $0x44] sm:$0xf]
        %v364 = vld [vmem:[#allocation5 + $0x48] sm:$0xff]
        %v365 = vld [vmem:[#allocation5 + $0x50] sm:$0xf]
        %v366 = vld [vmem:[#allocation5 + $0x54] sm:$0xff]
        %v367 = vld [vmem:[#allocation5 + $0x5c] sm:$0xf]
        %v368 = vld [vmem:[#allocation5 + $0x60] sm:$0xff]
        %v369 = vld [vmem:[#allocation5 + $0x68] sm:$0xf]
        %v370 = vld [vmem:[#allocation5 + $0x6c] sm:$0xff]
        %v371 = vld [vmem:[#allocation5 + $0x74] sm:$0xf]
        %v372 = vld [vmem:[#allocation5 + $0x78] sm:$0xff]
        %v373 = vld [vmem:[#allocation5 + $0x80] sm:$0xf]
        %v374 = vld [vmem:[#allocation5 + $0x84] sm:$0xff]
        %v375 = vld [vmem:[#allocation5 + $0x8c] sm:$0xf]
        %v376 = vld [vmem:[#allocation5 + $0x90] sm:$0xff]
        %v377 = vld [vmem:[#allocation5 + $0x98] sm:$0xf]
        %v378 = vld [vmem:[#allocation5 + $0x9c] sm:$0xff]
        %v379 = vld [vmem:[#allocation5 + $0xa4] sm:$0xf]
        %v380 = vld [vmem:[#allocation5 + $0xa8] sm:$0xff]
        %v381 = vld [vmem:[#allocation5 + $0xb0] sm:$0xf]
        %v382 = vld [vmem:[#allocation5 + $0xb4] sm:$0xff]
        %v383 = vld [vmem:[#allocation5 + $0xbc] sm:$0xf]
        %v384 = vld [vmem:[%s4] sm:$0x7]
        %v386 = vlaneseq
        %v387 = vshrl.u32 %v386, 7
        %v388 = vsub.s32 0, %v387
        %v389 = vrot.slane %v384, %v388
        %v390 = vlaneseq
        %v391 = vshrl.u32 %v390, 7
        %v392 = vsub.s32 1, %v391
        %v393 = vrot.slane %v384, %v392
        %v394 = vlaneseq
        %v395 = vshrl.u32 %v394, 7
        %v396 = vsub.s32 2, %v395
        %v397 = vrot.slane %v384, %v396
        %v433 = vunpack.c.l.b16 %v352
        %v434 = vunpack.c.h.b16 %v352
        %v435 = vunpack.c.l.b16 %v353
        %v436 = vunpack.c.l.b16 %v354
        %v437 = vunpack.c.h.b16 %v354
        %v438 = vunpack.c.l.b16 %v355
        %v439 = vunpack.c.l.b16 %v356
        %v440 = vunpack.c.h.b16 %v356
        %v441 = vunpack.c.l.b16 %v357
        %v442 = vunpack.c.l.b16 %v358
        %v443 = vunpack.c.h.b16 %v358
        %v444 = vunpack.c.l.b16 %v359
        %v445 = vunpack.c.l.b16 %v360
        %v446 = vunpack.c.h.b16 %v360
        %v447 = vunpack.c.l.b16 %v361
        %v448 = vunpack.c.l.b16 %v362
        %v449 = vunpack.c.h.b16 %v362
        %v450 = vunpack.c.l.b16 %v363
        %v451 = vunpack.c.l.b16 %v364
        %v452 = vunpack.c.h.b16 %v364
        %v453 = vunpack.c.l.b16 %v365
        %v454 = vunpack.c.l.b16 %v366
        %v455 = vunpack.c.h.b16 %v366
        %v456 = vunpack.c.l.b16 %v367
        %v457 = vunpack.c.l.b16 %v368
        %v458 = vunpack.c.h.b16 %v368
        %v459 = vunpack.c.l.b16 %v369
        %v460 = vunpack.c.l.b16 %v370
        %v461 = vunpack.c.h.b16 %v370
        %v462 = vunpack.c.l.b16 %v371
        %v463 = vunpack.c.l.b16 %v372
        %v464 = vunpack.c.h.b16 %v372
        %v465 = vunpack.c.l.b16 %v373
        %v466 = vunpack.c.l.b16 %v374
        %v467 = vunpack.c.h.b16 %v374
        %v468 = vunpack.c.l.b16 %v375
        %v469 = vunpack.c.l.b16 %v376
        %v470 = vunpack.c.h.b16 %v376
        %v471 = vunpack.c.l.b16 %v377
        %v472 = vunpack.c.l.b16 %v378
        %v473 = vunpack.c.h.b16 %v378
        %v474 = vunpack.c.l.b16 %v379
        %v475 = vunpack.c.l.b16 %v380
        %v476 = vunpack.c.h.b16 %v380
        %v477 = vunpack.c.l.b16 %v381
        %v478 = vunpack.c.l.b16 %v382
        %v479 = vunpack.c.h.b16 %v382
        %v480 = vunpack.c.l.b16 %v383
        %v481 = vpack.c.b16 %v436, %v433
        %v482 = vpack.c.b16 %v437, %v434
        %v483 = vpack.c.b16 %v438, %v435
        %v484 = vpack.c.b16 %v442, %v439
        %v485 = vpack.c.b16 %v443, %v440
        %v486 = vpack.c.b16 %v444, %v441
        %v487 = vpack.c.b16 %v448, %v445
        %v488 = vpack.c.b16 %v449, %v446
        %v489 = vpack.c.b16 %v450, %v447
        %v490 = vpack.c.b16 %v454, %v451
        %v491 = vpack.c.b16 %v455, %v452
        %v492 = vpack.c.b16 %v456, %v453
        %v493 = vpack.c.b16 %v460, %v457
        %v494 = vpack.c.b16 %v461, %v458
        %v495 = vpack.c.b16 %v462, %v459
        %v496 = vpack.c.b16 %v466, %v463
        %v497 = vpack.c.b16 %v467, %v464
        %v498 = vpack.c.b16 %v468, %v465
        %v499 = vpack.c.b16 %v472, %v469
        %v500 = vpack.c.b16 %v473, %v470
        %v501 = vpack.c.b16 %v474, %v471
        %v502 = vpack.c.b16 %v478, %v475
        %v503 = vpack.c.b16 %v479, %v476
        %v504 = vpack.c.b16 %v480, %v477
        %529 = vmatprep.subr.bf16.mxu0 %v503
        %530 = vmatpush1.bf16.msra.mxu0 %v502
        %531 = vmatprep.subr.bf16.mxu0 %v500
        %532 = vmatpush1.bf16.msra.mxu0 %v499
        %533 = vmatprep.subr.bf16.mxu0 %v497
        %534 = vmatpush1.bf16.msra.mxu0 %v496
        %535 = vmatprep.subr.bf16.mxu0 %v494
        %536 = vmatpush1.bf16.msra.mxu0 %v493
        %537 = vmatprep.subr.bf16.mxu0 %v491
        %538 = vmatpush1.bf16.msra.mxu0 %v490
        %539 = vmatprep.subr.bf16.mxu0 %v488
        %540 = vmatpush1.bf16.msra.mxu0 %v487
        %541 = vmatprep.subr.bf16.mxu0 %v485
        %542 = vmatpush1.bf16.msra.mxu0 %v484
        %543 = vmatprep.subr.bf16.mxu0 %v482
        %544 = vmatpush1.bf16.msra.mxu0 %v481
        %545 = vmatprep.subr.bf16.mxu0 0
        %546 = vmatpush2.bf16.msra.mxu0 0
        %547 = vmatprep.subr.bf16.mxu0 0
        %548 = vmatpush2.bf16.msra.mxu0 0
        %549 = vmatprep.subr.bf16.mxu0 0
        %550 = vmatpush2.bf16.msra.mxu0 0
        %551 = vmatprep.subr.bf16.mxu0 0
        %552 = vmatpush2.bf16.msra.mxu0 0
        %553 = vmatprep.subr.bf16.mxu0 0
        %554 = vmatpush2.bf16.msra.mxu0 0
        %555 = vmatprep.subr.bf16.mxu0 0
        %556 = vmatpush2.bf16.msra.mxu0 0
        %557 = vmatprep.subr.bf16.mxu0 0
        %558 = vmatpush2.bf16.msra.mxu0 0
        %559 = vmatprep.subr.bf16.mxu0 0
        %560 = vmatpush2.bf16.msra.mxu0 0
        %561 = vmatprep.mubr.bf16.mxu0 0
        %562 = vmatmul.mubr.bf16.gmra.mxu0 %v350
        %v563 = vpop.f32.mrf.mxu0
        %v564 = vadd.f32 %v389, %v563
        %v565 = vpop.f32.mrf.mxu0
        %v566 = vadd.f32 %v393, %v565
        %v567 = vpop.f32.mrf.mxu0
        %v568 = vadd.f32 %v389, %v567
        %v569 = vpop.f32.mrf.mxu0
        %v570 = vadd.f32 %v393, %v569
        %571 = vmatprep.mubr.bf16.mxu0 0
        %572 = vmatmul.mubr.bf16.gmra.mxu0 %v351
        %v573 = vpop.f32.mrf.mxu0
        %v574 = vadd.f32 %v389, %v573
        %v575 = vpop.f32.mrf.mxu0
        %v576 = vadd.f32 %v393, %v575
        %v577 = vpop.f32.mrf.mxu0
        %v578 = vadd.f32 %v389, %v577
        %v579 = vpop.f32.mrf.mxu0
        %v580 = vadd.f32 %v393, %v579
        %581 = vdwg.mxu0
        %582 = vmatprep.subr.bf16.mxu0 0
        %583 = vmatpush1.bf16.msra.mxu0 %v504
        %584 = vmatprep.subr.bf16.mxu0 0
        %585 = vmatpush1.bf16.msra.mxu0 %v501
        %586 = vmatprep.subr.bf16.mxu0 0
        %587 = vmatpush1.bf16.msra.mxu0 %v498
        %588 = vmatprep.subr.bf16.mxu0 0
        %589 = vmatpush1.bf16.msra.mxu0 %v495
        %590 = vmatprep.subr.bf16.mxu0 0
        %591 = vmatpush1.bf16.msra.mxu0 %v492
        %592 = vmatprep.subr.bf16.mxu0 0
        %593 = vmatpush1.bf16.msra.mxu0 %v489
        %594 = vmatprep.subr.bf16.mxu0 0
        %595 = vmatpush1.bf16.msra.mxu0 %v486
        %596 = vmatprep.subr.bf16.mxu0 0
        %597 = vmatpush1.bf16.msra.mxu0 %v483
        %598 = vmatprep.subr.bf16.mxu0 0
        %599 = vmatpush2.bf16.msra.mxu0 0
        %600 = vmatprep.subr.bf16.mxu0 0
        %601 = vmatpush2.bf16.msra.mxu0 0
        %602 = vmatprep.subr.bf16.mxu0 0
        %603 = vmatpush2.bf16.msra.mxu0 0
        %604 = vmatprep.subr.bf16.mxu0 0
        %605 = vmatpush2.bf16.msra.mxu0 0
        %606 = vmatprep.subr.bf16.mxu0 0
        %607 = vmatpush2.bf16.msra.mxu0 0
        %608 = vmatprep.subr.bf16.mxu0 0
        %609 = vmatpush2.bf16.msra.mxu0 0
        %610 = vmatprep.subr.bf16.mxu0 0
        %611 = vmatpush2.bf16.msra.mxu0 0
        %612 = vmatprep.subr.bf16.mxu0 0
        %613 = vmatpush2.bf16.msra.mxu0 0
        %614 = vmatprep.mubr.bf16.mxu0 0
        %615 = vmatmul.mubr.bf16.gmra.mxu0 %v350
        %v616 = vpop.f32.mrf.mxu0
        %v617 = vadd.f32 %v397, %v616
        %v618 = vpop.f32.mrf.mxu0
        %v619 = vpop.f32.mrf.mxu0
        %v620 = vadd.f32 %v397, %v619
        %v621 = vpop.f32.mrf.mxu0
        %622 = vmatprep.mubr.bf16.mxu0 0
        %623 = vmatmul.mubr.bf16.gmra.mxu0 %v351
        %v624 = vpop.f32.mrf.mxu0
        %v625 = vadd.f32 %v397, %v624
        %v626 = vpop.f32.mrf.mxu0
        %v627 = vpop.f32.mrf.mxu0
        %v628 = vadd.f32 %v397, %v627
        %v629 = vpop.f32.mrf.mxu0
        %630 = vdwg.mxu0
        %v631 = vpack.c.bf16 %v568, %v564
        %v632 = vpack.c.bf16 %v570, %v566
        %v633 = vpack.c.bf16 %v620, %v617
        %v634 = vpack.c.bf16 %v578, %v574
        %v635 = vpack.c.bf16 %v580, %v576
        %v636 = vpack.c.bf16 %v628, %v625
        %v643 = vunpack.c.l.b16 %v631
        %v644 = vunpack.c.l.b16 %v632
        %v645 = vunpack.c.l.b16 %v633
        %v646 = vunpack.c.h.b16 %v631
        %v647 = vunpack.c.h.b16 %v632
        %v648 = vunpack.c.h.b16 %v633
        %v649 = vunpack.c.l.b16 %v634
        %v650 = vunpack.c.l.b16 %v635
        %v651 = vunpack.c.l.b16 %v636
        %v652 = vunpack.c.h.b16 %v634
        %v653 = vunpack.c.h.b16 %v635
        %v654 = vunpack.c.h.b16 %v636
        %v655 = vpack.c.b16 %v644, %v643
        %v656 = vpack.c.b16 %v645, %v645
        %v657 = vpack.c.b16 %v647, %v646
        %v658 = vpack.c.b16 %v648, %v648
        %v659 = vpack.c.b16 %v650, %v649
        %v660 = vpack.c.b16 %v651, %v651
        %v661 = vpack.c.b16 %v653, %v652
        %v662 = vpack.c.b16 %v654, %v654
        %671 = vst [vmem:[%s275] sm:$0xff] %v655
        %672 = vst [vmem:[%s275 + $0x8] sm:$0xf] %v656
        %673 = vst [vmem:[%s275 + $0xc] sm:$0xff] %v657
        %674 = vst [vmem:[%s275 + $0x14] sm:$0xf] %v658
        %675 = vst [vmem:[%s275 + $0x18] sm:$0xff] %v659
        %676 = vst [vmem:[%s275 + $0x20] sm:$0xf] %v660
        %677 = vst [vmem:[%s275 + $0x24] sm:$0xff] %v661
        %678 = vst [vmem:[%s275 + $0x2c] sm:$0xf] %v662
        %s679 = sand.u32 %s157, 1
        %s680 = scalar_lea.sflag [#allocation4], %s679
        %s681 = sand.u32 %s157, 1
        %s682 = smul.addr %s681, 48
        %s683 = scalar_lea.vmem [#allocation7], %s682
        // Predicated region
        $region49: #{tpu_custom_call.1} parent=39 // pred_check
          %p684 = pneg %p167
        $region50: #{tpu_custom_call.1} parent=39 // pred_check_branch
          %686 = sbr.rel (%p684) target = $region52
        $region51: #{tpu_custom_call.1} parent=39 // pred_region
          %s687 = smul.u32 4, %s28
          %s689 = ssub.s32 768, 768
          %690 = vsyncadd %s680, %s689
          %s691 = smul.addr %s687, 3
          %s692 = smul.addr %s27, 12
          %s693 = sadd.s32 %s691, %s692
          %s694 = smul.addr %s693, 64
          %s695 = scalar_lea.hbm %s5, %s694
          %s696 = sshll.u32 %s683, 4
          %s697 = int_to_ptr.vmem [resolvable:$true] %s696
          %702 = dma.vmem_to_hbm [thread:$0]  %s697, 768, %s695, %s680, 192, 192, 12
        $region52: #{tpu_custom_call.1} parent=39 // pred_fallthru
          _
      $region40: #{tpu_custom_call.1} parent=5 // pred_fallthru
        _
      %p703 = scmp.le.s32.totalorder 2, %s18
      // Predicated region
      $region53: #{tpu_custom_call.1} parent=5 // pred_check
        %p704 = pneg %p703
      $region54: #{tpu_custom_call.1} parent=5 // pred_check_branch
        %706 = sbr.rel (%p704) target = $region56
      $region55: #{tpu_custom_call.1} parent=5 // pred_region
        %s707 = ssub.s32 %s18, 2
        // Predicated region
        $region57: #{tpu_custom_call.1} parent=55 // pred_check
          %p708 = pneg %p173
        $region58: #{tpu_custom_call.1} parent=55 // pred_check_branch
          %710 = sbr.rel (%p708) target = $region60
        $region59: #{tpu_custom_call.1} parent=55 // pred_region
          %s711 = sand.u32 %s158, 1
          %s712 = scalar_lea.sflag [#allocation4], %s711
          %s713 = sand.u32 %s158, 1
          %s714 = smul.addr %s713, 48
          %s715 = scalar_lea.vmem [#allocation7], %s714
          %716 = dma.done %s712, 768
        $region60: #{tpu_custom_call.1} parent=55 // pred_fallthru
          _
      $region56: #{tpu_custom_call.1} parent=5 // pred_fallthru
        _
    $region6: #{tpu_custom_call.1} parent=1 // loop_footer
      %s22 = sadd.s32 1, %s18
    $region7: #{tpu_custom_call.1} parent=1 // loop_footer_branch
      %17 = sbr.rel target = $region3
    $region8: #{tpu_custom_call.1} parent=1 // loop_exit
      _
    %717 = vsyncpa [#allocation3], 1
    %s718 = scalar_lea.sflag [#allocation3], 1
    %719 = vsyncpa %s718, 1
    %720 = vsyncpa [#allocation6], 1
    %721 = vsyncpa [#allocation4], 1
    %s722 = scalar_lea.sflag [#allocation4], 1
    %723 = vsyncpa %s722, 1

</llo_original>
